<compile_context>
chip_gen: v7x
topology: tpu7x:2x2x1
jax: 0.10.0
libtpu: 0.0.40
codegen_flags: <defaults>
</compile_context>

<pallas_src>
import jax
import jax.numpy as jnp
import numpy as np
from jax.experimental import pallas as pl
from jax.experimental.pallas import tpu as pltpu


def _round_up(x, m):
    return ((x + m - 1) // m) * m


def _make_conv_kernel(n_chunks, node_chunk):
    """Builds the per-conv kernel (closure over static node-chunking params)."""

    def kernel(blk_start_ref, blk_cnt_ref,           # scalar prefetch (SMEM)
               row_ref, col_ref, hp_ref,             # tiled / resident inputs
               w1_ref, w1p_ref, b1_ref, b2_ref, w2_ref,
               out_ref,                              # output == resident accumulator
               u_ref, v_ref):                        # f32 node pre-product scratch
        f32 = jnp.float32
        t = pl.program_id(0)
        te = row_ref.shape[0]
        h_pad = u_ref.shape[1]

        # ---- once per conv: node pre-products (b1 folded into U) + acc init ----
        @pl.when(t == 0)
        def _init():
            hp = hp_ref[...]
            u_ref[...] = jnp.dot(hp, w1_ref[...],
                                 preferred_element_type=f32) + b1_ref[...]
            v_ref[...] = jnp.dot(hp, w1p_ref[...], preferred_element_type=f32)
            out_ref[...] = jnp.full(out_ref.shape, -jnp.inf, out_ref.dtype)

        row = row_ref[...]            # (TE,1) int32, -1 == padding
        col = col_ref[...]            # (TE,1) int32, destination-sorted, -1 pad at end

        # ---- gather fused with linear-1: pre_e = U[row_e] - V[col_e]
        #      (one-hot matmuls, node axis chunked to bound VMEM for large N) ----
        ids0 = jax.lax.broadcasted_iota(jnp.int32, (te, node_chunk), 1)
        pre = jnp.zeros((te, h_pad), f32)
        for c in range(n_chunks):                     # static, small unrolled loop
            base = c * node_chunk
            oh_row = (ids0 == (row - base)).astype(f32)   # (TE, chunk), padded rows all-0
            oh_col = (ids0 == (col - base)).astype(f32)
            pre = pre + jnp.dot(oh_row, u_ref[pl.ds(base, node_chunk), :],
                                preferred_element_type=f32)
            pre = pre - jnp.dot(oh_col, v_ref[pl.ds(base, node_chunk), :],
                                preferred_element_type=f32)

        z = jnp.maximum(pre, 0.0)                               # ReLU inside the MLP
        msg = jnp.dot(z, w2_ref[...], preferred_element_type=f32)   # (TE,H_pad); +b2 later

        # ---- destination-sorted segment max over the node blocks this tile hits ----
        nb0 = blk_start_ref[t]
        ncnt = blk_cnt_ref[t]
        neg_inf = jnp.float32(-jnp.inf)

        def agg_block(b, carry):
            nb = pl.multiple_of((nb0 + b) * 8, 8)
            rows = []
            for j in range(8):                                   # unrolled 8-node block
                sel = jnp.where(col == nb + j, msg, neg_inf)     # (TE, H_pad)
                rows.append(jnp.max(sel, axis=0, keepdims=True)) # (1, H_pad)
            blk = jnp.concatenate(rows, axis=0)                  # (8, H_pad)
            cur = out_ref[pl.ds(nb, 8), :]
            out_ref[pl.ds(nb, 8), :] = jnp.maximum(cur, blk)     # aligned (8,H_pad) RMW
            return carry

        jax.lax.fori_loop(0, ncnt, agg_block, 0)

        # ---- finalize: +b2 (exact under max), fused .relu(), zero fill for empties ----
        @pl.when(t == pl.num_programs(0) - 1)
        def _finalize():
            out_ref[...] = jnp.maximum(out_ref[...] + b2_ref[...], 0.0)

    return kernel


def pointnet_conv(h, pos, row_sorted, col_sorted, layer_params, *,
                  edge_tile=512, node_chunk=1024):
    """One PointNetLayer (plus the following .relu()) as a single pallas_call."""
    n, f = h.shape
    w1, b1 = layer_params["w1"], layer_params["b1"]
    w2, b2 = layer_params["w2"], layer_params["b2"]
    hdim = w1.shape[1]
    assert w1.shape[0] == f + 3, "W1 must have in_channels + 3 rows"

    f32 = jnp.float32
    h_pad = _round_up(hdim, 128)                  # lane-dense datapath (32/64 -> 128)

    # Node padding: multiple of 8 (aligned 8-row aggregation blocks) and of chunk.
    node_chunk = _round_up(node_chunk, 128)
    n_pad8 = _round_up(max(n, 8), 8)
    if n_pad8 <= node_chunk:
        nchunk = n_pad8
        n_pad = n_pad8
    else:
        nchunk = node_chunk
        n_pad = _round_up(n, nchunk)
    n_chunks = n_pad // nchunk

    hp = jnp.concatenate([h, pos], axis=1).astype(f32)           # (N, F+3)
    hp = jnp.pad(hp, ((0, n_pad - n), (0, 0)))                   # (N_pad, F+3)

    # W1 padded to H_pad columns; W1_pos_full = W1 with the first F rows zeroed so
    # V = hp @ W1_pos_full == pos @ W1[F:, :]  (no separate (N,3) pos input needed).
    w1_pad = jnp.zeros((f + 3, h_pad), f32).at[:, :hdim].set(w1.astype(f32))
    w1p_pad = jnp.zeros((f + 3, h_pad), f32).at[f:, :hdim].set(w1[f:].astype(f32))
    b1_pad = jnp.zeros((1, h_pad), f32).at[:, :hdim].set(b1.reshape(1, hdim).astype(f32))
    w2_pad = jnp.zeros((h_pad, h_pad), f32).at[:hdim, :hdim].set(w2.astype(f32))
    b2_pad = jnp.zeros((1, h_pad), f32).at[:, :hdim].set(b2.reshape(1, hdim).astype(f32))

    # Edge tiling (edges are already destination-sorted; -1 padding at the end).
    e = int(row_sorted.shape[0])
    edge_tile = _round_up(edge_tile, 8)
    te = min(_round_up(max(e, 8), 8), edge_tile)
    n_tiles = -(-e // te)
    e_pad = n_tiles * te
    row_p = jnp.pad(row_sorted.astype(jnp.int32), (0, e_pad - e),
                    constant_values=-1).reshape(e_pad, 1)
    col_p = jnp.pad(col_sorted.astype(jnp.int32), (0, e_pad - e),
                    constant_values=-1).reshape(e_pad, 1)

    # Per-tile destination node-block range (scalar prefetch): with sorted edges the
    # kernel only visits the few 8-row node blocks this tile's targets fall in.
    col_t = col_p.reshape(n_tiles, te)
    valid = col_t >= 0
    cmin = jnp.min(jnp.where(valid, col_t, n_pad), axis=1)
    cmax = jnp.max(jnp.where(valid, col_t, -1), axis=1)
    blk_start = (cmin // 8).astype(jnp.int32)
    blk_cnt = jnp.maximum(cmax // 8 + 1 - blk_start, 0).astype(jnp.int32)

    # Explicit VMEM budget (resident node slabs + weights + per-tile buffers).
    lane = 128
    resident = (n_pad * _round_up(f + 3, lane) * 4      # hp slab (lane-padded)
                + n_pad * h_pad * 4                      # out (accumulator)
                + 2 * n_pad * h_pad * 4)                 # U, V (f32 scratch)
    weights = (2 * (f + 3) * h_pad + h_pad * h_pad + 2 * h_pad) * 4
    per_tile = 2 * 2 * te * lane * 4                     # double-buffered row/col tiles
    compute = 3 * te * nchunk * 4 + 6 * te * h_pad * 4   # one-hots/iota + pre/z/msg temps
    est = resident + weights + per_tile + compute
    vmem_limit = int(min(max(est * 3 // 2, 32 * 2**20), 56 * 2**20))  # <=~56MiB (v7x safe)

    full2 = lambda t, *_: (0, 0)
    tiled = lambda t, *_: (t, 0)
    grid_spec = pltpu.PrefetchScalarGridSpec(
        num_scalar_prefetch=2,
        grid=(n_tiles,),
        in_specs=[
            pl.BlockSpec((te, 1), tiled),               # row (source) indices, tiled
            pl.BlockSpec((te, 1), tiled),               # col (target, sorted) indices
            pl.BlockSpec((n_pad, f + 3), full2),        # [h | pos] node slab (resident)
            pl.BlockSpec((f + 3, h_pad), full2),        # W1 (column-padded)
            pl.BlockSpec((f + 3, h_pad), full2),        # W1 pos rows only (rest zeroed)
            pl.BlockSpec((1, h_pad), full2),            # b1 (used once at init)
            pl.BlockSpec((1, h_pad), full2),            # b2 (used once at finalize)
            pl.BlockSpec((h_pad, h_pad), full2),        # W2 (padded)
        ],
        out_specs=pl.BlockSpec((n_pad, h_pad), full2),  # resident accumulator output
        scratch_shapes=[
            pltpu.VMEM((n_pad, h_pad), f32),            # U = [h|pos]@W1 + b1 (f32)
            pltpu.VMEM((n_pad, h_pad), f32),            # V = pos@W1_pos      (f32)
        ],
    )

    kernel = _make_conv_kernel(n_chunks, nchunk)
    out = pl.pallas_call(
        kernel,
        out_shape=jax.ShapeDtypeStruct((n_pad, h_pad), f32),
        grid_spec=grid_spec,
        compiler_params=pltpu.CompilerParams(
            dimension_semantics=("arbitrary",),         # edge axis accumulates into out
            vmem_limit_bytes=vmem_limit),
    )(blk_start, blk_cnt, row_p, col_p, hp, w1_pad, w1p_pad, b1_pad, b2_pad, w2_pad)
    # TODO(synk): on v7x, split edge tiles across the 2 TensorCores (leading parallel
    # grid axis with per-core partial (N,H_pad) maxima combined by a trailing maximum).
    return out[:n, :hdim]


def pointnet_forward(pos, edge_index, batch, params):
    """PointNet.forward: h = relu(conv1(pos,pos,ei)); h = relu(conv2(h,pos,ei))."""
    del batch  # accepted for signature parity; unused by the reference forward
    row = edge_index[0].astype(jnp.int32)   # source node j
    col = edge_index[1].astype(jnp.int32)   # target node i (aggregation index)
    order = jnp.argsort(col)                # destination-sort once, reused by both convs
    row_s, col_s = row[order], col[order]
    h = pointnet_conv(pos, pos, row_s, col_s, params["conv1"])   # post-conv relu fused
    h = pointnet_conv(h, pos, row_s, col_s, params["conv2"])     # post-conv relu fused
    return h


def init_params(key, in_num_feature=3, hidden_num_feature=32, output_num_feature=64):
    """Synthetic Linear weights with nn.Linear-style fan-in init (module shapes)."""
    def linear(k, fan_in, fan_out):
        kw, kb = jax.random.split(k)
        bound = 1.0 / float(fan_in) ** 0.5
        w = jax.random.uniform(kw, (fan_in, fan_out), jnp.float32, -bound, bound)
        b = jax.random.uniform(kb, (1, fan_out), jnp.float32, -bound, bound)
        return w, b

    k1, k2, k3, k4 = jax.random.split(key, 4)
    w1a, b1a = linear(k1, in_num_feature + 3, hidden_num_feature)
    w2a, b2a = linear(k2, hidden_num_feature, hidden_num_feature)
    w1b, b1b = linear(k3, hidden_num_feature + 3, output_num_feature)
    w2b, b2b = linear(k4, output_num_feature, output_num_feature)
    return {
        "conv1": {"w1": w1a, "b1": b1a, "w2": w2a, "b2": b2a},
        "conv2": {"w1": w1b, "b1": b1b, "w2": w2b, "b2": b2b},
    }


def _ref_conv(h, pos, row, col, p):
    """Pure-JAX reference for one PointNetLayer + .relu() (correctness check)."""
    x = jnp.concatenate([h[row], pos[row] - pos[col]], axis=1)
    z = jnp.maximum(x @ p["w1"] + p["b1"], 0.0)
    msg = z @ p["w2"] + p["b2"]
    out = jnp.full((h.shape[0], msg.shape[1]), -jnp.inf, jnp.float32)
    out = out.at[col].max(msg)
    out = jnp.where(out == -jnp.inf, 0.0, out)    # PyG zero fill for empty segments
    return jnp.maximum(out, 0.0)


if __name__ == "__main__":
    B, n_per_graph = 2, 8
    in_nf, hidden_nf, out_nf = 3, 32, 64

    key = jax.random.PRNGKey(0)
    k_pos, k_params = jax.random.split(key)

    N = B * n_per_graph
    pos = jax.random.normal(k_pos, (N, 3), jnp.float32)

    # Ring graph (both directions) per graph, flattened PyG-style with node offsets.
    src = jnp.arange(n_per_graph, dtype=jnp.int32)
    dst = (src + 1) % n_per_graph
    e_src = jnp.concatenate([src, dst])
    e_dst = jnp.concatenate([dst, src])
    per_graph = []
    for g in range(B):
        off = g * n_per_graph
        per_graph.append(jnp.stack([e_src + off, e_dst + off], axis=0))
    edge_index = jnp.concatenate(per_graph, axis=1)                     # (2, 32)
    batch = jnp.repeat(jnp.arange(B, dtype=jnp.int32), n_per_graph)     # (16,)

    params = init_params(k_params, in_nf, hidden_nf, out_nf)

    fwd = jax.jit(pointnet_forward)
    h_out = fwd(pos, edge_index, batch, params)
    jax.block_until_ready(h_out)

    # Pure-JAX reference check.
    r, c = edge_index[0], edge_index[1]
    h_ref = _ref_conv(pos, pos, r, c, params["conv1"])
    h_ref = _ref_conv(h_ref, pos, r, c, params["conv2"])

    assert h_out.shape == (N, out_nf)
    assert bool(jnp.all(jnp.isfinite(h_out)))
    np.testing.assert_allclose(np.asarray(h_out), np.asarray(h_ref), atol=2e-3, rtol=2e-3)
    print("KERNEL_OK")
</pallas_src>

<mosaic_0001>
module attributes {stable_mosaic.version = 11 : i64} {
  func.func @kernel(%arg0: i32, %arg1: memref<1xi32, #tpu.memory_space<smem>>, %arg2: memref<1xi32, #tpu.memory_space<smem>>, %arg3: memref<32x1xi32, #tpu.memory_space<vmem>>, %arg4: memref<32x1xi32, #tpu.memory_space<vmem>>, %arg5: memref<16x6xf32, #tpu.memory_space<vmem>>, %arg6: memref<6x128xf32, #tpu.memory_space<vmem>>, %arg7: memref<6x128xf32, #tpu.memory_space<vmem>>, %arg8: memref<1x128xf32, #tpu.memory_space<vmem>>, %arg9: memref<1x128xf32, #tpu.memory_space<vmem>>, %arg10: memref<128x128xf32, #tpu.memory_space<vmem>>, %arg11: memref<16x128xf32, #tpu.memory_space<vmem>>, %arg12: memref<16x128xf32, #tpu.memory_space<vmem>>, %arg13: memref<16x128xf32, #tpu.memory_space<vmem>>) attributes {dimension_semantics = [#tpu.dimension_semantics<arbitrary>], iteration_bounds = array<i64: 1>, scalar_prefetch = 2 : i64, scratch_operands = 2 : i64, tpu.core_type = #tpu.core_type<tc>, window_params = [{transform_indices = @transform_0, window_bounds = array<i64: 32, 1>}, {transform_indices = @transform_1, window_bounds = array<i64: 32, 1>}, {pipeline_mode = #tpu.pipeline_mode<synchronous>, transform_indices = @transform_2, window_bounds = array<i64: 16, 6>}, {pipeline_mode = #tpu.pipeline_mode<synchronous>, transform_indices = @transform_3, window_bounds = array<i64: 6, 128>}, {pipeline_mode = #tpu.pipeline_mode<synchronous>, transform_indices = @transform_4, window_bounds = array<i64: 6, 128>}, {pipeline_mode = #tpu.pipeline_mode<synchronous>, transform_indices = @transform_5, window_bounds = array<i64: 1, 128>}, {pipeline_mode = #tpu.pipeline_mode<synchronous>, transform_indices = @transform_6, window_bounds = array<i64: 1, 128>}, {pipeline_mode = #tpu.pipeline_mode<synchronous>, transform_indices = @transform_7, window_bounds = array<i64: 128, 128>}, {pipeline_mode = #tpu.pipeline_mode<synchronous>, transform_indices = @transform_8, window_bounds = array<i64: 16, 128>}]} {
    %c0_i32 = arith.constant 0 : i32
    %0 = arith.cmpi eq, %arg0, %c0_i32 : i32
    %1 = arith.extui %0 : i1 to i32
    %c0_i32_0 = arith.constant 0 : i32
    %2 = arith.cmpi ne, %1, %c0_i32_0 : i32
    scf.if %2 {
      %c0_21 = arith.constant 0 : index
      %c0_22 = arith.constant 0 : index
      %38 = vector.load %arg5[%c0_21, %c0_22] : memref<16x6xf32, #tpu.memory_space<vmem>>, vector<16x6xf32>
      %c0_23 = arith.constant 0 : index
      %c0_24 = arith.constant 0 : index
      %39 = vector.load %arg6[%c0_23, %c0_24] : memref<6x128xf32, #tpu.memory_space<vmem>>, vector<6x128xf32>
      %cst_25 = arith.constant dense<0.000000e+00> : vector<16x128xf32>
      %40 = tpu.matmul %38, %39, %cst_25 {dimension_numbers = #tpu.dot_dimension_numbers<[1], [0], [0], [1], [0, 0, 1, 1], [], []>} : vector<16x6xf32>, vector<6x128xf32>, vector<16x128xf32> -> vector<16x128xf32>
      %c0_26 = arith.constant 0 : index
      %c0_27 = arith.constant 0 : index
      %41 = vector.load %arg8[%c0_26, %c0_27] : memref<1x128xf32, #tpu.memory_space<vmem>>, vector<1x128xf32>
      %42 = vector.broadcast %41 : vector<1x128xf32> to vector<16x128xf32>
      %43 = arith.addf %40, %42 : vector<16x128xf32>
      %c0_28 = arith.constant 0 : index
      %c0_29 = arith.constant 0 : index
      %44 = vector.load %arg12[%c0_28, %c0_29] : memref<16x128xf32, #tpu.memory_space<vmem>>, vector<16x128xf32>
      tpu.vector_store %arg12[%c0_28, %c0_29], %43 {strides = array<i32>} : memref<16x128xf32, #tpu.memory_space<vmem>>, vector<16x128xf32>,
      %c0_30 = arith.constant 0 : index
      %c0_31 = arith.constant 0 : index
      %45 = vector.load %arg7[%c0_30, %c0_31] : memref<6x128xf32, #tpu.memory_space<vmem>>, vector<6x128xf32>
      %cst_32 = arith.constant dense<0.000000e+00> : vector<16x128xf32>
      %46 = tpu.matmul %38, %45, %cst_32 {dimension_numbers = #tpu.dot_dimension_numbers<[1], [0], [0], [1], [0, 0, 1, 1], [], []>} : vector<16x6xf32>, vector<6x128xf32>, vector<16x128xf32> -> vector<16x128xf32>
      %c0_33 = arith.constant 0 : index
      %c0_34 = arith.constant 0 : index
      %47 = vector.load %arg13[%c0_33, %c0_34] : memref<16x128xf32, #tpu.memory_space<vmem>>, vector<16x128xf32>
      tpu.vector_store %arg13[%c0_33, %c0_34], %46 {strides = array<i32>} : memref<16x128xf32, #tpu.memory_space<vmem>>, vector<16x128xf32>,
      %cst_35 = arith.constant 0xFF800000 : f32
      %48 = vector.broadcast %cst_35 : f32 to vector<16x128xf32>
      %c0_36 = arith.constant 0 : index
      %c0_37 = arith.constant 0 : index
      %49 = vector.load %arg11[%c0_36, %c0_37] : memref<16x128xf32, #tpu.memory_space<vmem>>, vector<16x128xf32>
      tpu.vector_store %arg11[%c0_36, %c0_37], %48 {strides = array<i32>} : memref<16x128xf32, #tpu.memory_space<vmem>>, vector<16x128xf32>,
    } else {
    }
    %c0 = arith.constant 0 : index
    %c0_1 = arith.constant 0 : index
    %3 = vector.load %arg3[%c0, %c0_1] : memref<32x1xi32, #tpu.memory_space<vmem>>, vector<32x1xi32>
    %c0_2 = arith.constant 0 : index
    %c0_3 = arith.constant 0 : index
    %4 = vector.load %arg4[%c0_2, %c0_3] : memref<32x1xi32, #tpu.memory_space<vmem>>, vector<32x1xi32>
    %5 = tpu.iota {dimensions = array<i32: 1>} : vector<32x16xi32>
    %cst = arith.constant 0.000000e+00 : f32
    %6 = vector.broadcast %cst : f32 to vector<32x128xf32>
    %c0_i32_4 = arith.constant 0 : i32
    %7 = vector.broadcast %c0_i32_4 : i32 to vector<32x1xi32>
    %8 = arith.subi %3, %7 : vector<32x1xi32>
    %9 = vector.broadcast %8 : vector<32x1xi32> to vector<32x16xi32>
    %10 = arith.cmpi eq, %5, %9 : vector<32x16xi32>
    %11 = arith.extui %10 : vector<32x16xi1> to vector<32x16xi32>
    %12 = arith.sitofp %11 : vector<32x16xi32> to vector<32x16xf32>
    %c0_i32_5 = arith.constant 0 : i32
    %13 = vector.broadcast %c0_i32_5 : i32 to vector<32x1xi32>
    %14 = arith.subi %4, %13 : vector<32x1xi32>
    %15 = vector.broadcast %14 : vector<32x1xi32> to vector<32x16xi32>
    %16 = arith.cmpi eq, %5, %15 : vector<32x16xi32>
    %17 = arith.extui %16 : vector<32x16xi1> to vector<32x16xi32>
    %18 = arith.sitofp %17 : vector<32x16xi32> to vector<32x16xf32>
    %c0_6 = arith.constant 0 : index
    %c0_7 = arith.constant 0 : index
    %19 = vector.load %arg12[%c0_6, %c0_7] : memref<16x128xf32, #tpu.memory_space<vmem>>, vector<16x128xf32>
    %cst_8 = arith.constant dense<0.000000e+00> : vector<32x128xf32>
    %20 = tpu.matmul %12, %19, %cst_8 {dimension_numbers = #tpu.dot_dimension_numbers<[1], [0], [0], [1], [0, 0, 1, 1], [], []>} : vector<32x16xf32>, vector<16x128xf32>, vector<32x128xf32> -> vector<32x128xf32>
    %21 = arith.addf %6, %20 : vector<32x128xf32>
    %c0_9 = arith.constant 0 : index
    %c0_10 = arith.constant 0 : index
    %22 = vector.load %arg13[%c0_9, %c0_10] : memref<16x128xf32, #tpu.memory_space<vmem>>, vector<16x128xf32>
    %cst_11 = arith.constant dense<0.000000e+00> : vector<32x128xf32>
    %23 = tpu.matmul %18, %22, %cst_11 {dimension_numbers = #tpu.dot_dimension_numbers<[1], [0], [0], [1], [0, 0, 1, 1], [], []>} : vector<32x16xf32>, vector<16x128xf32>, vector<32x128xf32> -> vector<32x128xf32>
    %24 = arith.subf %21, %23 : vector<32x128xf32>
    %cst_12 = arith.constant 0.000000e+00 : f32
    %25 = vector.broadcast %cst_12 : f32 to vector<32x128xf32>
    %26 = arith.maximumf %24, %25 : vector<32x128xf32>
    %c0_13 = arith.constant 0 : index
    %c0_14 = arith.constant 0 : index
    %27 = vector.load %arg10[%c0_13, %c0_14] : memref<128x128xf32, #tpu.memory_space<vmem>>, vector<128x128xf32>
    %cst_15 = arith.constant dense<0.000000e+00> : vector<32x128xf32>
    %28 = tpu.matmul %26, %27, %cst_15 {dimension_numbers = #tpu.dot_dimension_numbers<[1], [0], [0], [1], [0, 0, 1, 1], [], []>} : vector<32x128xf32>, vector<128x128xf32>, vector<32x128xf32> -> vector<32x128xf32>
    %29 = arith.index_cast %arg0 : i32 to index
    %30 = memref.load %arg1[%29] : memref<1xi32, #tpu.memory_space<smem>>
    %31 = arith.index_cast %arg0 : i32 to index
    %32 = memref.load %arg2[%31] : memref<1xi32, #tpu.memory_space<smem>>
    %c0_i32_16 = arith.constant 0 : i32
    %cst_17 = arith.constant 0xFF800000 : f32
    %c0_i32_18 = arith.constant 0 : i32
    %33 = arith.subi %32, %c0_i32_18 : i32
    %34 = arith.addi %c0_i32_18, %33 : i32
    %c1_i32 = arith.constant 1 : i32
    scf.for %arg14 = %c0_i32_18 to %34 step %c1_i32  : i32 {
      %38 = arith.addi %30, %arg14 : i32
      %c8_i32 = arith.constant 8 : i32
      %39 = arith.muli %38, %c8_i32 : i32
      %40 = tpu.assume_multiple %39, 8 : i32
      %c0_i32_21 = arith.constant 0 : i32
      %41 = arith.addi %40, %c0_i32_21 : i32
      %42 = vector.broadcast %41 : i32 to vector<32x1xi32>
      %43 = arith.cmpi eq, %4, %42 : vector<32x1xi32>
      %44 = vector.shape_cast %43 : vector<32x1xi1> to vector<32x1xi1>
      %45 = vector.broadcast %44 : vector<32x1xi1> to vector<32x128xi1>
      %46 = vector.broadcast %cst_17 : f32 to vector<32x128xf32>
      %47 = arith.select %45, %28, %46 : vector<32x128xi1>, vector<32x128xf32>
      %cst_22 = arith.constant dense<0xFF800000> : vector<128xf32>
      %48 = vector.multi_reduction <maximumf>, %47, %cst_22 [0] : vector<32x128xf32> to vector<128xf32>
      %49 = vector.shape_cast %48 : vector<128xf32> to vector<1x128xf32>
      %c1_i32_23 = arith.constant 1 : i32
      %50 = arith.addi %40, %c1_i32_23 : i32
      %51 = vector.broadcast %50 : i32 to vector<32x1xi32>
      %52 = arith.cmpi eq, %4, %51 : vector<32x1xi32>
      %53 = vector.shape_cast %52 : vector<32x1xi1> to vector<32x1xi1>
      %54 = vector.broadcast %53 : vector<32x1xi1> to vector<32x128xi1>
      %55 = vector.broadcast %cst_17 : f32 to vector<32x128xf32>
      %56 = arith.select %54, %28, %55 : vector<32x128xi1>, vector<32x128xf32>
      %cst_24 = arith.constant dense<0xFF800000> : vector<128xf32>
      %57 = vector.multi_reduction <maximumf>, %56, %cst_24 [0] : vector<32x128xf32> to vector<128xf32>
      %58 = vector.shape_cast %57 : vector<128xf32> to vector<1x128xf32>
      %c2_i32 = arith.constant 2 : i32
      %59 = arith.addi %40, %c2_i32 : i32
      %60 = vector.broadcast %59 : i32 to vector<32x1xi32>
      %61 = arith.cmpi eq, %4, %60 : vector<32x1xi32>
      %62 = vector.shape_cast %61 : vector<32x1xi1> to vector<32x1xi1>
      %63 = vector.broadcast %62 : vector<32x1xi1> to vector<32x128xi1>
      %64 = vector.broadcast %cst_17 : f32 to vector<32x128xf32>
      %65 = arith.select %63, %28, %64 : vector<32x128xi1>, vector<32x128xf32>
      %cst_25 = arith.constant dense<0xFF800000> : vector<128xf32>
      %66 = vector.multi_reduction <maximumf>, %65, %cst_25 [0] : vector<32x128xf32> to vector<128xf32>
      %67 = vector.shape_cast %66 : vector<128xf32> to vector<1x128xf32>
      %c3_i32 = arith.constant 3 : i32
      %68 = arith.addi %40, %c3_i32 : i32
      %69 = vector.broadcast %68 : i32 to vector<32x1xi32>
      %70 = arith.cmpi eq, %4, %69 : vector<32x1xi32>
      %71 = vector.shape_cast %70 : vector<32x1xi1> to vector<32x1xi1>
      %72 = vector.broadcast %71 : vector<32x1xi1> to vector<32x128xi1>
      %73 = vector.broadcast %cst_17 : f32 to vector<32x128xf32>
      %74 = arith.select %72, %28, %73 : vector<32x128xi1>, vector<32x128xf32>
      %cst_26 = arith.constant dense<0xFF800000> : vector<128xf32>
      %75 = vector.multi_reduction <maximumf>, %74, %cst_26 [0] : vector<32x128xf32> to vector<128xf32>
      %76 = vector.shape_cast %75 : vector<128xf32> to vector<1x128xf32>
      %c4_i32 = arith.constant 4 : i32
      %77 = arith.addi %40, %c4_i32 : i32
      %78 = vector.broadcast %77 : i32 to vector<32x1xi32>
      %79 = arith.cmpi eq, %4, %78 : vector<32x1xi32>
      %80 = vector.shape_cast %79 : vector<32x1xi1> to vector<32x1xi1>
      %81 = vector.broadcast %80 : vector<32x1xi1> to vector<32x128xi1>
      %82 = vector.broadcast %cst_17 : f32 to vector<32x128xf32>
      %83 = arith.select %81, %28, %82 : vector<32x128xi1>, vector<32x128xf32>
      %cst_27 = arith.constant dense<0xFF800000> : vector<128xf32>
      %84 = vector.multi_reduction <maximumf>, %83, %cst_27 [0] : vector<32x128xf32> to vector<128xf32>
      %85 = vector.shape_cast %84 : vector<128xf32> to vector<1x128xf32>
      %c5_i32 = arith.constant 5 : i32
      %86 = arith.addi %40, %c5_i32 : i32
      %87 = vector.broadcast %86 : i32 to vector<32x1xi32>
      %88 = arith.cmpi eq, %4, %87 : vector<32x1xi32>
      %89 = vector.shape_cast %88 : vector<32x1xi1> to vector<32x1xi1>
      %90 = vector.broadcast %89 : vector<32x1xi1> to vector<32x128xi1>
      %91 = vector.broadcast %cst_17 : f32 to vector<32x128xf32>
      %92 = arith.select %90, %28, %91 : vector<32x128xi1>, vector<32x128xf32>
      %cst_28 = arith.constant dense<0xFF800000> : vector<128xf32>
      %93 = vector.multi_reduction <maximumf>, %92, %cst_28 [0] : vector<32x128xf32> to vector<128xf32>
      %94 = vector.shape_cast %93 : vector<128xf32> to vector<1x128xf32>
      %c6_i32 = arith.constant 6 : i32
      %95 = arith.addi %40, %c6_i32 : i32
      %96 = vector.broadcast %95 : i32 to vector<32x1xi32>
      %97 = arith.cmpi eq, %4, %96 : vector<32x1xi32>
      %98 = vector.shape_cast %97 : vector<32x1xi1> to vector<32x1xi1>
      %99 = vector.broadcast %98 : vector<32x1xi1> to vector<32x128xi1>
      %100 = vector.broadcast %cst_17 : f32 to vector<32x128xf32>
      %101 = arith.select %99, %28, %100 : vector<32x128xi1>, vector<32x128xf32>
      %cst_29 = arith.constant dense<0xFF800000> : vector<128xf32>
      %102 = vector.multi_reduction <maximumf>, %101, %cst_29 [0] : vector<32x128xf32> to vector<128xf32>
      %103 = vector.shape_cast %102 : vector<128xf32> to vector<1x128xf32>
      %c7_i32 = arith.constant 7 : i32
      %104 = arith.addi %40, %c7_i32 : i32
      %105 = vector.broadcast %104 : i32 to vector<32x1xi32>
      %106 = arith.cmpi eq, %4, %105 : vector<32x1xi32>
      %107 = vector.shape_cast %106 : vector<32x1xi1> to vector<32x1xi1>
      %108 = vector.broadcast %107 : vector<32x1xi1> to vector<32x128xi1>
      %109 = vector.broadcast %cst_17 : f32 to vector<32x128xf32>
      %110 = arith.select %108, %28, %109 : vector<32x128xi1>, vector<32x128xf32>
      %cst_30 = arith.constant dense<0xFF800000> : vector<128xf32>
      %111 = vector.multi_reduction <maximumf>, %110, %cst_30 [0] : vector<32x128xf32> to vector<128xf32>
      %112 = vector.shape_cast %111 : vector<128xf32> to vector<1x128xf32>
      %113 = tpu.concatenate %49, %58, %67, %76, %85, %94, %103, %112 in 0 : vector<1x128xf32>, vector<1x128xf32>, vector<1x128xf32>, vector<1x128xf32>, vector<1x128xf32>, vector<1x128xf32>, vector<1x128xf32>, vector<1x128xf32> -> vector<8x128xf32>
      %114 = arith.index_cast %40 : i32 to index
      %c0_31 = arith.constant 0 : index
      %115 = vector.load %arg11[%114, %c0_31] : memref<16x128xf32, #tpu.memory_space<vmem>>, vector<8x128xf32>
      %116 = arith.maximumf %115, %113 : vector<8x128xf32>
      %117 = arith.index_cast %40 : i32 to index
      %c0_32 = arith.constant 0 : index
      %118 = vector.load %arg11[%117, %c0_32] : memref<16x128xf32, #tpu.memory_space<vmem>>, vector<8x128xf32>
      tpu.vector_store %arg11[%117, %c0_32], %116 {strides = array<i32>} : memref<16x128xf32, #tpu.memory_space<vmem>>, vector<8x128xf32>,
    }
    %c0_i32_19 = arith.constant 0 : i32
    %35 = arith.cmpi eq, %arg0, %c0_i32_19 : i32
    %36 = arith.extui %35 : i1 to i32
    %c0_i32_20 = arith.constant 0 : i32
    %37 = arith.cmpi ne, %36, %c0_i32_20 : i32
    scf.if %37 {
      %c0_21 = arith.constant 0 : index
      %c0_22 = arith.constant 0 : index
      %38 = vector.load %arg11[%c0_21, %c0_22] : memref<16x128xf32, #tpu.memory_space<vmem>>, vector<16x128xf32>
      %c0_23 = arith.constant 0 : index
      %c0_24 = arith.constant 0 : index
      %39 = vector.load %arg9[%c0_23, %c0_24] : memref<1x128xf32, #tpu.memory_space<vmem>>, vector<1x128xf32>
      %40 = vector.broadcast %39 : vector<1x128xf32> to vector<16x128xf32>
      %41 = arith.addf %38, %40 : vector<16x128xf32>
      %cst_25 = arith.constant 0.000000e+00 : f32
      %42 = vector.broadcast %cst_25 : f32 to vector<16x128xf32>
      %43 = arith.maximumf %41, %42 : vector<16x128xf32>
      %c0_26 = arith.constant 0 : index
      %c0_27 = arith.constant 0 : index
      %44 = vector.load %arg11[%c0_26, %c0_27] : memref<16x128xf32, #tpu.memory_space<vmem>>, vector<16x128xf32>
      tpu.vector_store %arg11[%c0_26, %c0_27], %43 {strides = array<i32>} : memref<16x128xf32, #tpu.memory_space<vmem>>, vector<16x128xf32>,
    } else {
    }
    return
  }
  func.func @transform_0(%arg0: i32, %arg1: memref<1xi32, #tpu.memory_space<smem>>, %arg2: memref<1xi32, #tpu.memory_space<smem>>) -> (i32, i32) {
    %c0_i32 = arith.constant 0 : i32
    %c0_i32_0 = arith.constant 0 : i32
    return %arg0, %c0_i32 : i32, i32
  }
  func.func @transform_1(%arg0: i32, %arg1: memref<1xi32, #tpu.memory_space<smem>>, %arg2: memref<1xi32, #tpu.memory_space<smem>>) -> (i32, i32) {
    %c0_i32 = arith.constant 0 : i32
    %c0_i32_0 = arith.constant 0 : i32
    return %arg0, %c0_i32 : i32, i32
  }
  func.func @transform_2(%arg0: i32, %arg1: memref<1xi32, #tpu.memory_space<smem>>, %arg2: memref<1xi32, #tpu.memory_space<smem>>) -> (i32, i32) {
    %c0_i32 = arith.constant 0 : i32
    %c0_i32_0 = arith.constant 0 : i32
    %c0_i32_1 = arith.constant 0 : i32
    return %c0_i32, %c0_i32_0 : i32, i32
  }
  func.func @transform_3(%arg0: i32, %arg1: memref<1xi32, #tpu.memory_space<smem>>, %arg2: memref<1xi32, #tpu.memory_space<smem>>) -> (i32, i32) {
    %c0_i32 = arith.constant 0 : i32
    %c0_i32_0 = arith.constant 0 : i32
    %c0_i32_1 = arith.constant 0 : i32
    return %c0_i32, %c0_i32_0 : i32, i32
  }
  func.func @transform_4(%arg0: i32, %arg1: memref<1xi32, #tpu.memory_space<smem>>, %arg2: memref<1xi32, #tpu.memory_space<smem>>) -> (i32, i32) {
    %c0_i32 = arith.constant 0 : i32
    %c0_i32_0 = arith.constant 0 : i32
    %c0_i32_1 = arith.constant 0 : i32
    return %c0_i32, %c0_i32_0 : i32, i32
  }
  func.func @transform_5(%arg0: i32, %arg1: memref<1xi32, #tpu.memory_space<smem>>, %arg2: memref<1xi32, #tpu.memory_space<smem>>) -> (i32, i32) {
    %c0_i32 = arith.constant 0 : i32
    %c0_i32_0 = arith.constant 0 : i32
    %c0_i32_1 = arith.constant 0 : i32
    return %c0_i32, %c0_i32_0 : i32, i32
  }
  func.func @transform_6(%arg0: i32, %arg1: memref<1xi32, #tpu.memory_space<smem>>, %arg2: memref<1xi32, #tpu.memory_space<smem>>) -> (i32, i32) {
    %c0_i32 = arith.constant 0 : i32
    %c0_i32_0 = arith.constant 0 : i32
    %c0_i32_1 = arith.constant 0 : i32
    return %c0_i32, %c0_i32_0 : i32, i32
  }
  func.func @transform_7(%arg0: i32, %arg1: memref<1xi32, #tpu.memory_space<smem>>, %arg2: memref<1xi32, #tpu.memory_space<smem>>) -> (i32, i32) {
    %c0_i32 = arith.constant 0 : i32
    %c0_i32_0 = arith.constant 0 : i32
    %c0_i32_1 = arith.constant 0 : i32
    return %c0_i32, %c0_i32_0 : i32, i32
  }
  func.func @transform_8(%arg0: i32, %arg1: memref<1xi32, #tpu.memory_space<smem>>, %arg2: memref<1xi32, #tpu.memory_space<smem>>) -> (i32, i32) {
    %c0_i32 = arith.constant 0 : i32
    %c0_i32_0 = arith.constant 0 : i32
    %c0_i32_1 = arith.constant 0 : i32
    return %c0_i32, %c0_i32_0 : i32, i32
  }
}

module attributes {stable_mosaic.version = 11 : i64} {
  func.func @kernel(%arg0: i32, %arg1: memref<1xi32, #tpu.memory_space<smem>>, %arg2: memref<1xi32, #tpu.memory_space<smem>>, %arg3: memref<32x1xi32, #tpu.memory_space<vmem>>, %arg4: memref<32x1xi32, #tpu.memory_space<vmem>>, %arg5: memref<16x35xf32, #tpu.memory_space<vmem>>, %arg6: memref<35x128xf32, #tpu.memory_space<vmem>>, %arg7: memref<35x128xf32, #tpu.memory_space<vmem>>, %arg8: memref<1x128xf32, #tpu.memory_space<vmem>>, %arg9: memref<1x128xf32, #tpu.memory_space<vmem>>, %arg10: memref<128x128xf32, #tpu.memory_space<vmem>>, %arg11: memref<16x128xf32, #tpu.memory_space<vmem>>, %arg12: memref<16x128xf32, #tpu.memory_space<vmem>>, %arg13: memref<16x128xf32, #tpu.memory_space<vmem>>) attributes {dimension_semantics = [#tpu.dimension_semantics<arbitrary>], iteration_bounds = array<i64: 1>, scalar_prefetch = 2 : i64, scratch_operands = 2 : i64, tpu.core_type = #tpu.core_type<tc>, window_params = [{transform_indices = @transform_0, window_bounds = array<i64: 32, 1>}, {transform_indices = @transform_1, window_bounds = array<i64: 32, 1>}, {pipeline_mode = #tpu.pipeline_mode<synchronous>, transform_indices = @transform_2, window_bounds = array<i64: 16, 35>}, {pipeline_mode = #tpu.pipeline_mode<synchronous>, transform_indices = @transform_3, window_bounds = array<i64: 35, 128>}, {pipeline_mode = #tpu.pipeline_mode<synchronous>, transform_indices = @transform_4, window_bounds = array<i64: 35, 128>}, {pipeline_mode = #tpu.pipeline_mode<synchronous>, transform_indices = @transform_5, window_bounds = array<i64: 1, 128>}, {pipeline_mode = #tpu.pipeline_mode<synchronous>, transform_indices = @transform_6, window_bounds = array<i64: 1, 128>}, {pipeline_mode = #tpu.pipeline_mode<synchronous>, transform_indices = @transform_7, window_bounds = array<i64: 128, 128>}, {pipeline_mode = #tpu.pipeline_mode<synchronous>, transform_indices = @transform_8, window_bounds = array<i64: 16, 128>}]} {
    %c0_i32 = arith.constant 0 : i32
    %0 = arith.cmpi eq, %arg0, %c0_i32 : i32
    %1 = arith.extui %0 : i1 to i32
    %c0_i32_0 = arith.constant 0 : i32
    %2 = arith.cmpi ne, %1, %c0_i32_0 : i32
    scf.if %2 {
      %c0_21 = arith.constant 0 : index
      %c0_22 = arith.constant 0 : index
      %38 = vector.load %arg5[%c0_21, %c0_22] : memref<16x35xf32, #tpu.memory_space<vmem>>, vector<16x35xf32>
      %c0_23 = arith.constant 0 : index
      %c0_24 = arith.constant 0 : index
      %39 = vector.load %arg6[%c0_23, %c0_24] : memref<35x128xf32, #tpu.memory_space<vmem>>, vector<35x128xf32>
      %cst_25 = arith.constant dense<0.000000e+00> : vector<16x128xf32>
      %40 = tpu.matmul %38, %39, %cst_25 {dimension_numbers = #tpu.dot_dimension_numbers<[1], [0], [0], [1], [0, 0, 1, 1], [], []>} : vector<16x35xf32>, vector<35x128xf32>, vector<16x128xf32> -> vector<16x128xf32>
      %c0_26 = arith.constant 0 : index
      %c0_27 = arith.constant 0 : index
      %41 = vector.load %arg8[%c0_26, %c0_27] : memref<1x128xf32, #tpu.memory_space<vmem>>, vector<1x128xf32>
      %42 = vector.broadcast %41 : vector<1x128xf32> to vector<16x128xf32>
      %43 = arith.addf %40, %42 : vector<16x128xf32>
      %c0_28 = arith.constant 0 : index
      %c0_29 = arith.constant 0 : index
      %44 = vector.load %arg12[%c0_28, %c0_29] : memref<16x128xf32, #tpu.memory_space<vmem>>, vector<16x128xf32>
      tpu.vector_store %arg12[%c0_28, %c0_29], %43 {strides = array<i32>} : memref<16x128xf32, #tpu.memory_space<vmem>>, vector<16x128xf32>,
      %c0_30 = arith.constant 0 : index
      %c0_31 = arith.constant 0 : index
      %45 = vector.load %arg7[%c0_30, %c0_31] : memref<35x128xf32, #tpu.memory_space<vmem>>, vector<35x128xf32>
      %cst_32 = arith.constant dense<0.000000e+00> : vector<16x128xf32>
      %46 = tpu.matmul %38, %45, %cst_32 {dimension_numbers = #tpu.dot_dimension_numbers<[1], [0], [0], [1], [0, 0, 1, 1], [], []>} : vector<16x35xf32>, vector<35x128xf32>, vector<16x128xf32> -> vector<16x128xf32>
      %c0_33 = arith.constant 0 : index
      %c0_34 = arith.constant 0 : index
      %47 = vector.load %arg13[%c0_33, %c0_34] : memref<16x128xf32, #tpu.memory_space<vmem>>, vector<16x128xf32>
      tpu.vector_store %arg13[%c0_33, %c0_34], %46 {strides = array<i32>} : memref<16x128xf32, #tpu.memory_space<vmem>>, vector<16x128xf32>,
      %cst_35 = arith.constant 0xFF800000 : f32
      %48 = vector.broadcast %cst_35 : f32 to vector<16x128xf32>
      %c0_36 = arith.constant 0 : index
      %c0_37 = arith.constant 0 : index
      %49 = vector.load %arg11[%c0_36, %c0_37] : memref<16x128xf32, #tpu.memory_space<vmem>>, vector<16x128xf32>
      tpu.vector_store %arg11[%c0_36, %c0_37], %48 {strides = array<i32>} : memref<16x128xf32, #tpu.memory_space<vmem>>, vector<16x128xf32>,
    } else {
    }
    %c0 = arith.constant 0 : index
    %c0_1 = arith.constant 0 : index
    %3 = vector.load %arg3[%c0, %c0_1] : memref<32x1xi32, #tpu.memory_space<vmem>>, vector<32x1xi32>
    %c0_2 = arith.constant 0 : index
    %c0_3 = arith.constant 0 : index
    %4 = vector.load %arg4[%c0_2, %c0_3] : memref<32x1xi32, #tpu.memory_space<vmem>>, vector<32x1xi32>
    %5 = tpu.iota {dimensions = array<i32: 1>} : vector<32x16xi32>
    %cst = arith.constant 0.000000e+00 : f32
    %6 = vector.broadcast %cst : f32 to vector<32x128xf32>
    %c0_i32_4 = arith.constant 0 : i32
    %7 = vector.broadcast %c0_i32_4 : i32 to vector<32x1xi32>
    %8 = arith.subi %3, %7 : vector<32x1xi32>
    %9 = vector.broadcast %8 : vector<32x1xi32> to vector<32x16xi32>
    %10 = arith.cmpi eq, %5, %9 : vector<32x16xi32>
    %11 = arith.extui %10 : vector<32x16xi1> to vector<32x16xi32>
    %12 = arith.sitofp %11 : vector<32x16xi32> to vector<32x16xf32>
    %c0_i32_5 = arith.constant 0 : i32
    %13 = vector.broadcast %c0_i32_5 : i32 to vector<32x1xi32>
    %14 = arith.subi %4, %13 : vector<32x1xi32>
    %15 = vector.broadcast %14 : vector<32x1xi32> to vector<32x16xi32>
    %16 = arith.cmpi eq, %5, %15 : vector<32x16xi32>
    %17 = arith.extui %16 : vector<32x16xi1> to vector<32x16xi32>
    %18 = arith.sitofp %17 : vector<32x16xi32> to vector<32x16xf32>
    %c0_6 = arith.constant 0 : index
    %c0_7 = arith.constant 0 : index
    %19 = vector.load %arg12[%c0_6, %c0_7] : memref<16x128xf32, #tpu.memory_space<vmem>>, vector<16x128xf32>
    %cst_8 = arith.constant dense<0.000000e+00> : vector<32x128xf32>
    %20 = tpu.matmul %12, %19, %cst_8 {dimension_numbers = #tpu.dot_dimension_numbers<[1], [0], [0], [1], [0, 0, 1, 1], [], []>} : vector<32x16xf32>, vector<16x128xf32>, vector<32x128xf32> -> vector<32x128xf32>
    %21 = arith.addf %6, %20 : vector<32x128xf32>
    %c0_9 = arith.constant 0 : index
    %c0_10 = arith.constant 0 : index
    %22 = vector.load %arg13[%c0_9, %c0_10] : memref<16x128xf32, #tpu.memory_space<vmem>>, vector<16x128xf32>
    %cst_11 = arith.constant dense<0.000000e+00> : vector<32x128xf32>
    %23 = tpu.matmul %18, %22, %cst_11 {dimension_numbers = #tpu.dot_dimension_numbers<[1], [0], [0], [1], [0, 0, 1, 1], [], []>} : vector<32x16xf32>, vector<16x128xf32>, vector<32x128xf32> -> vector<32x128xf32>
    %24 = arith.subf %21, %23 : vector<32x128xf32>
    %cst_12 = arith.constant 0.000000e+00 : f32
    %25 = vector.broadcast %cst_12 : f32 to vector<32x128xf32>
    %26 = arith.maximumf %24, %25 : vector<32x128xf32>
    %c0_13 = arith.constant 0 : index
    %c0_14 = arith.constant 0 : index
    %27 = vector.load %arg10[%c0_13, %c0_14] : memref<128x128xf32, #tpu.memory_space<vmem>>, vector<128x128xf32>
    %cst_15 = arith.constant dense<0.000000e+00> : vector<32x128xf32>
    %28 = tpu.matmul %26, %27, %cst_15 {dimension_numbers = #tpu.dot_dimension_numbers<[1], [0], [0], [1], [0, 0, 1, 1], [], []>} : vector<32x128xf32>, vector<128x128xf32>, vector<32x128xf32> -> vector<32x128xf32>
    %29 = arith.index_cast %arg0 : i32 to index
    %30 = memref.load %arg1[%29] : memref<1xi32, #tpu.memory_space<smem>>
    %31 = arith.index_cast %arg0 : i32 to index
    %32 = memref.load %arg2[%31] : memref<1xi32, #tpu.memory_space<smem>>
    %c0_i32_16 = arith.constant 0 : i32
    %cst_17 = arith.constant 0xFF800000 : f32
    %c0_i32_18 = arith.constant 0 : i32
    %33 = arith.subi %32, %c0_i32_18 : i32
    %34 = arith.addi %c0_i32_18, %33 : i32
    %c1_i32 = arith.constant 1 : i32
    scf.for %arg14 = %c0_i32_18 to %34 step %c1_i32  : i32 {
      %38 = arith.addi %30, %arg14 : i32
      %c8_i32 = arith.constant 8 : i32
      %39 = arith.muli %38, %c8_i32 : i32
      %40 = tpu.assume_multiple %39, 8 : i32
      %c0_i32_21 = arith.constant 0 : i32
      %41 = arith.addi %40, %c0_i32_21 : i32
      %42 = vector.broadcast %41 : i32 to vector<32x1xi32>
      %43 = arith.cmpi eq, %4, %42 : vector<32x1xi32>
      %44 = vector.shape_cast %43 : vector<32x1xi1> to vector<32x1xi1>
      %45 = vector.broadcast %44 : vector<32x1xi1> to vector<32x128xi1>
      %46 = vector.broadcast %cst_17 : f32 to vector<32x128xf32>
      %47 = arith.select %45, %28, %46 : vector<32x128xi1>, vector<32x128xf32>
      %cst_22 = arith.constant dense<0xFF800000> : vector<128xf32>
      %48 = vector.multi_reduction <maximumf>, %47, %cst_22 [0] : vector<32x128xf32> to vector<128xf32>
      %49 = vector.shape_cast %48 : vector<128xf32> to vector<1x128xf32>
      %c1_i32_23 = arith.constant 1 : i32
      %50 = arith.addi %40, %c1_i32_23 : i32
      %51 = vector.broadcast %50 : i32 to vector<32x1xi32>
      %52 = arith.cmpi eq, %4, %51 : vector<32x1xi32>
      %53 = vector.shape_cast %52 : vector<32x1xi1> to vector<32x1xi1>
      %54 = vector.broadcast %53 : vector<32x1xi1> to vector<32x128xi1>
      %55 = vector.broadcast %cst_17 : f32 to vector<32x128xf32>
      %56 = arith.select %54, %28, %55 : vector<32x128xi1>, vector<32x128xf32>
      %cst_24 = arith.constant dense<0xFF800000> : vector<128xf32>
      %57 = vector.multi_reduction <maximumf>, %56, %cst_24 [0] : vector<32x128xf32> to vector<128xf32>
      %58 = vector.shape_cast %57 : vector<128xf32> to vector<1x128xf32>
      %c2_i32 = arith.constant 2 : i32
      %59 = arith.addi %40, %c2_i32 : i32
      %60 = vector.broadcast %59 : i32 to vector<32x1xi32>
      %61 = arith.cmpi eq, %4, %60 : vector<32x1xi32>
      %62 = vector.shape_cast %61 : vector<32x1xi1> to vector<32x1xi1>
      %63 = vector.broadcast %62 : vector<32x1xi1> to vector<32x128xi1>
      %64 = vector.broadcast %cst_17 : f32 to vector<32x128xf32>
      %65 = arith.select %63, %28, %64 : vector<32x128xi1>, vector<32x128xf32>
      %cst_25 = arith.constant dense<0xFF800000> : vector<128xf32>
      %66 = vector.multi_reduction <maximumf>, %65, %cst_25 [0] : vector<32x128xf32> to vector<128xf32>
      %67 = vector.shape_cast %66 : vector<128xf32> to vector<1x128xf32>
      %c3_i32 = arith.constant 3 : i32
      %68 = arith.addi %40, %c3_i32 : i32
      %69 = vector.broadcast %68 : i32 to vector<32x1xi32>
      %70 = arith.cmpi eq, %4, %69 : vector<32x1xi32>
      %71 = vector.shape_cast %70 : vector<32x1xi1> to vector<32x1xi1>
      %72 = vector.broadcast %71 : vector<32x1xi1> to vector<32x128xi1>
      %73 = vector.broadcast %cst_17 : f32 to vector<32x128xf32>
      %74 = arith.select %72, %28, %73 : vector<32x128xi1>, vector<32x128xf32>
      %cst_26 = arith.constant dense<0xFF800000> : vector<128xf32>
      %75 = vector.multi_reduction <maximumf>, %74, %cst_26 [0] : vector<32x128xf32> to vector<128xf32>
      %76 = vector.shape_cast %75 : vector<128xf32> to vector<1x128xf32>
      %c4_i32 = arith.constant 4 : i32
      %77 = arith.addi %40, %c4_i32 : i32
      %78 = vector.broadcast %77 : i32 to vector<32x1xi32>
      %79 = arith.cmpi eq, %4, %78 : vector<32x1xi32>
      %80 = vector.shape_cast %79 : vector<32x1xi1> to vector<32x1xi1>
      %81 = vector.broadcast %80 : vector<32x1xi1> to vector<32x128xi1>
      %82 = vector.broadcast %cst_17 : f32 to vector<32x128xf32>
      %83 = arith.select %81, %28, %82 : vector<32x128xi1>, vector<32x128xf32>
      %cst_27 = arith.constant dense<0xFF800000> : vector<128xf32>
      %84 = vector.multi_reduction <maximumf>, %83, %cst_27 [0] : vector<32x128xf32> to vector<128xf32>
      %85 = vector.shape_cast %84 : vector<128xf32> to vector<1x128xf32>
      %c5_i32 = arith.constant 5 : i32
      %86 = arith.addi %40, %c5_i32 : i32
      %87 = vector.broadcast %86 : i32 to vector<32x1xi32>
      %88 = arith.cmpi eq, %4, %87 : vector<32x1xi32>
      %89 = vector.shape_cast %88 : vector<32x1xi1> to vector<32x1xi1>
      %90 = vector.broadcast %89 : vector<32x1xi1> to vector<32x128xi1>
      %91 = vector.broadcast %cst_17 : f32 to vector<32x128xf32>
      %92 = arith.select %90, %28, %91 : vector<32x128xi1>, vector<32x128xf32>
      %cst_28 = arith.constant dense<0xFF800000> : vector<128xf32>
      %93 = vector.multi_reduction <maximumf>, %92, %cst_28 [0] : vector<32x128xf32> to vector<128xf32>
      %94 = vector.shape_cast %93 : vector<128xf32> to vector<1x128xf32>
      %c6_i32 = arith.constant 6 : i32
      %95 = arith.addi %40, %c6_i32 : i32
      %96 = vector.broadcast %95 : i32 to vector<32x1xi32>
      %97 = arith.cmpi eq, %4, %96 : vector<32x1xi32>
      %98 = vector.shape_cast %97 : vector<32x1xi1> to vector<32x1xi1>
      %99 = vector.broadcast %98 : vector<32x1xi1> to vector<32x128xi1>
      %100 = vector.broadcast %cst_17 : f32 to vector<32x128xf32>
      %101 = arith.select %99, %28, %100 : vector<32x128xi1>, vector<32x128xf32>
      %cst_29 = arith.constant dense<0xFF800000> : vector<128xf32>
      %102 = vector.multi_reduction <maximumf>, %101, %cst_29 [0] : vector<32x128xf32> to vector<128xf32>
      %103 = vector.shape_cast %102 : vector<128xf32> to vector<1x128xf32>
      %c7_i32 = arith.constant 7 : i32
      %104 = arith.addi %40, %c7_i32 : i32
      %105 = vector.broadcast %104 : i32 to vector<32x1xi32>
      %106 = arith.cmpi eq, %4, %105 : vector<32x1xi32>
      %107 = vector.shape_cast %106 : vector<32x1xi1> to vector<32x1xi1>
      %108 = vector.broadcast %107 : vector<32x1xi1> to vector<32x128xi1>
      %109 = vector.broadcast %cst_17 : f32 to vector<32x128xf32>
      %110 = arith.select %108, %28, %109 : vector<32x128xi1>, vector<32x128xf32>
      %cst_30 = arith.constant dense<0xFF800000> : vector<128xf32>
      %111 = vector.multi_reduction <maximumf>, %110, %cst_30 [0] : vector<32x128xf32> to vector<128xf32>
      %112 = vector.shape_cast %111 : vector<128xf32> to vector<1x128xf32>
      %113 = tpu.concatenate %49, %58, %67, %76, %85, %94, %103, %112 in 0 : vector<1x128xf32>, vector<1x128xf32>, vector<1x128xf32>, vector<1x128xf32>, vector<1x128xf32>, vector<1x128xf32>, vector<1x128xf32>, vector<1x128xf32> -> vector<8x128xf32>
      %114 = arith.index_cast %40 : i32 to index
      %c0_31 = arith.constant 0 : index
      %115 = vector.load %arg11[%114, %c0_31] : memref<16x128xf32, #tpu.memory_space<vmem>>, vector<8x128xf32>
      %116 = arith.maximumf %115, %113 : vector<8x128xf32>
      %117 = arith.index_cast %40 : i32 to index
      %c0_32 = arith.constant 0 : index
      %118 = vector.load %arg11[%117, %c0_32] : memref<16x128xf32, #tpu.memory_space<vmem>>, vector<8x128xf32>
      tpu.vector_store %arg11[%117, %c0_32], %116 {strides = array<i32>} : memref<16x128xf32, #tpu.memory_space<vmem>>, vector<8x128xf32>,
    }
    %c0_i32_19 = arith.constant 0 : i32
    %35 = arith.cmpi eq, %arg0, %c0_i32_19 : i32
    %36 = arith.extui %35 : i1 to i32
    %c0_i32_20 = arith.constant 0 : i32
    %37 = arith.cmpi ne, %36, %c0_i32_20 : i32
    scf.if %37 {
      %c0_21 = arith.constant 0 : index
      %c0_22 = arith.constant 0 : index
      %38 = vector.load %arg11[%c0_21, %c0_22] : memref<16x128xf32, #tpu.memory_space<vmem>>, vector<16x128xf32>
      %c0_23 = arith.constant 0 : index
      %c0_24 = arith.constant 0 : index
      %39 = vector.load %arg9[%c0_23, %c0_24] : memref<1x128xf32, #tpu.memory_space<vmem>>, vector<1x128xf32>
      %40 = vector.broadcast %39 : vector<1x128xf32> to vector<16x128xf32>
      %41 = arith.addf %38, %40 : vector<16x128xf32>
      %cst_25 = arith.constant 0.000000e+00 : f32
      %42 = vector.broadcast %cst_25 : f32 to vector<16x128xf32>
      %43 = arith.maximumf %41, %42 : vector<16x128xf32>
      %c0_26 = arith.constant 0 : index
      %c0_27 = arith.constant 0 : index
      %44 = vector.load %arg11[%c0_26, %c0_27] : memref<16x128xf32, #tpu.memory_space<vmem>>, vector<16x128xf32>
      tpu.vector_store %arg11[%c0_26, %c0_27], %43 {strides = array<i32>} : memref<16x128xf32, #tpu.memory_space<vmem>>, vector<16x128xf32>,
    } else {
    }
    return
  }
  func.func @transform_0(%arg0: i32, %arg1: memref<1xi32, #tpu.memory_space<smem>>, %arg2: memref<1xi32, #tpu.memory_space<smem>>) -> (i32, i32) {
    %c0_i32 = arith.constant 0 : i32
    %c0_i32_0 = arith.constant 0 : i32
    return %arg0, %c0_i32 : i32, i32
  }
  func.func @transform_1(%arg0: i32, %arg1: memref<1xi32, #tpu.memory_space<smem>>, %arg2: memref<1xi32, #tpu.memory_space<smem>>) -> (i32, i32) {
    %c0_i32 = arith.constant 0 : i32
    %c0_i32_0 = arith.constant 0 : i32
    return %arg0, %c0_i32 : i32, i32
  }
  func.func @transform_2(%arg0: i32, %arg1: memref<1xi32, #tpu.memory_space<smem>>, %arg2: memref<1xi32, #tpu.memory_space<smem>>) -> (i32, i32) {
    %c0_i32 = arith.constant 0 : i32
    %c0_i32_0 = arith.constant 0 : i32
    %c0_i32_1 = arith.constant 0 : i32
    return %c0_i32, %c0_i32_0 : i32, i32
  }
  func.func @transform_3(%arg0: i32, %arg1: memref<1xi32, #tpu.memory_space<smem>>, %arg2: memref<1xi32, #tpu.memory_space<smem>>) -> (i32, i32) {
    %c0_i32 = arith.constant 0 : i32
    %c0_i32_0 = arith.constant 0 : i32
    %c0_i32_1 = arith.constant 0 : i32
    return %c0_i32, %c0_i32_0 : i32, i32
  }
  func.func @transform_4(%arg0: i32, %arg1: memref<1xi32, #tpu.memory_space<smem>>, %arg2: memref<1xi32, #tpu.memory_space<smem>>) -> (i32, i32) {
    %c0_i32 = arith.constant 0 : i32
    %c0_i32_0 = arith.constant 0 : i32
    %c0_i32_1 = arith.constant 0 : i32
    return %c0_i32, %c0_i32_0 : i32, i32
  }
  func.func @transform_5(%arg0: i32, %arg1: memref<1xi32, #tpu.memory_space<smem>>, %arg2: memref<1xi32, #tpu.memory_space<smem>>) -> (i32, i32) {
    %c0_i32 = arith.constant 0 : i32
    %c0_i32_0 = arith.constant 0 : i32
    %c0_i32_1 = arith.constant 0 : i32
    return %c0_i32, %c0_i32_0 : i32, i32
  }
  func.func @transform_6(%arg0: i32, %arg1: memref<1xi32, #tpu.memory_space<smem>>, %arg2: memref<1xi32, #tpu.memory_space<smem>>) -> (i32, i32) {
    %c0_i32 = arith.constant 0 : i32
    %c0_i32_0 = arith.constant 0 : i32
    %c0_i32_1 = arith.constant 0 : i32
    return %c0_i32, %c0_i32_0 : i32, i32
  }
  func.func @transform_7(%arg0: i32, %arg1: memref<1xi32, #tpu.memory_space<smem>>, %arg2: memref<1xi32, #tpu.memory_space<smem>>) -> (i32, i32) {
    %c0_i32 = arith.constant 0 : i32
    %c0_i32_0 = arith.constant 0 : i32
    %c0_i32_1 = arith.constant 0 : i32
    return %c0_i32, %c0_i32_0 : i32, i32
  }
  func.func @transform_8(%arg0: i32, %arg1: memref<1xi32, #tpu.memory_space<smem>>, %arg2: memref<1xi32, #tpu.memory_space<smem>>) -> (i32, i32) {
    %c0_i32 = arith.constant 0 : i32
    %c0_i32_0 = arith.constant 0 : i32
    %c0_i32_1 = arith.constant 0 : i32
    return %c0_i32, %c0_i32_0 : i32, i32
  }
}

</mosaic_0001>

<llo_original>
// kernel: pointnet_forward.3
$region0: #{pointnet_forward.3}
  #allocation0 [shape = 'u32[]', space=smem, size = 0x4, offset = 0x4, fixed_abs, tag = 'smem constant byte address 0x4 - core index']
  #allocation1 [shape = 'u32[144,128]{1,0:T(1,128)}', space=vmem, size = 0x12000, scoped, tag = 'internal scratch']
  #allocation2 [shape = 'f32[16,128]{1,0:T(8,128)}', space=vmem, size = 0x2000, scoped, tag = 'scratch operand']
  #allocation3 [shape = 'f32[16,128]{1,0:T(8,128)}', space=vmem, size = 0x2000, scoped, tag = 'scratch operand']
  #allocation4 [shape = 's32[1]{0}', space=sflag, size = 0x4, scoped, tag = 'scoped memory for pointnet_forward.3']
  #allocation5 [shape = 's32[1]{0:T(128)S(6)}', space=smem, size = 0x200, scoped, tag = 'prefetched SMEM operand 0']
  #allocation6 [shape = 's32[1]{0:T(128)S(6)}', space=smem, size = 0x200, scoped, tag = 'prefetched SMEM operand 1']
  %s0 = inlined_call_operand.<no memory space> [shape: s32[1], index: 0, kind: input, shape index: {}]
  %s1 = inlined_call_operand.<no memory space> [shape: s32[1], index: 1, kind: input, shape index: {}]
  %s2 = inlined_call_operand.vmem [shape: s32[32,1], index: 2, kind: input, shape index: {}]
  %s3 = inlined_call_operand.vmem [shape: s32[32,1], index: 3, kind: input, shape index: {}]
  %s4 = inlined_call_operand.vmem [shape: f32[16,35], index: 4, kind: input, shape index: {}]
  %s5 = inlined_call_operand.vmem [shape: f32[35,128], index: 5, kind: input, shape index: {}]
  %s6 = inlined_call_operand.vmem [shape: f32[35,128], index: 6, kind: input, shape index: {}]
  %s7 = inlined_call_operand.vmem [shape: f32[1,128], index: 7, kind: input, shape index: {}]
  %s8 = inlined_call_operand.vmem [shape: f32[1,128], index: 8, kind: input, shape index: {}]
  %s9 = inlined_call_operand.vmem [shape: f32[128,128], index: 9, kind: input, shape index: {}]
  %s10 = inlined_call_operand.hbm [shape: f32[16,128], index: 10, kind: output, shape index: {}]
  %s11 = sld [smem:[#allocation0]]
  $region57: #{pointnet_forward.3} parent=0
    _
  %s13 = ssub.s32 1, %s11
  %s14 = scalar_select 0, %s13, %s11
  %15 = sst [smem:[#allocation5]] %s0
  %16 = sst [smem:[#allocation6]] %s1
  $region1: #{pointnet_forward.3} parent=0
    #allocation7 [shape = 'u8[8192]{0}', space=vmem, size = 0x2000, scoped, tag = 'output window, operand 0, single buffered']
    #allocation8 [shape = 's32[1]{0}', space=sflag, size = 0x4, scoped, tag = 'scoped memory for pointnet_forward.3']
    %17 = vsyncpa [#allocation8], 0
    // Predicated region
    $region2: #{pointnet_forward.3} parent=1 // pred_check
      _
    $region3: #{pointnet_forward.3} parent=1 // pred_check_branch
      %19 = sbr.rel (0) target = $region5
    $region4: #{pointnet_forward.3} parent=1 // pred_region
      _
    $region5: #{pointnet_forward.3} parent=1 // pred_fallthru
      _
    // Predicated region
    $region6: #{pointnet_forward.3} parent=1 // pred_check
      _
    $region7: #{pointnet_forward.3} parent=1 // pred_check_branch
      %21 = sbr.rel (0) target = $region9
    $region8: #{pointnet_forward.3} parent=1 // pred_region
      _
    $region9: #{pointnet_forward.3} parent=1 // pred_fallthru
      _
    // Predicated region
    $region10: #{pointnet_forward.3} parent=1 // pred_check
      _
    $region11: #{pointnet_forward.3} parent=1 // pred_check_branch
      %23 = sbr.rel (0) target = $region13
    $region12: #{pointnet_forward.3} parent=1 // pred_region
      _
    $region13: #{pointnet_forward.3} parent=1 // pred_fallthru
      _
    // Predicated region
    $region14: #{pointnet_forward.3} parent=1 // pred_check
      _
    $region15: #{pointnet_forward.3} parent=1 // pred_check_branch
      %25 = sbr.rel (0) target = $region17
    $region16: #{pointnet_forward.3} parent=1 // pred_region
      _
    $region17: #{pointnet_forward.3} parent=1 // pred_fallthru
      _
    // Predicated region
    $region18: #{pointnet_forward.3} parent=1 // pred_check
      _
    $region19: #{pointnet_forward.3} parent=1 // pred_check_branch
      %27 = sbr.rel (0) target = $region21
    $region20: #{pointnet_forward.3} parent=1 // pred_region
      _
    $region21: #{pointnet_forward.3} parent=1 // pred_fallthru
      _
    // Predicated region
    $region22: #{pointnet_forward.3} parent=1 // pred_check
      _
    $region23: #{pointnet_forward.3} parent=1 // pred_check_branch
      %29 = sbr.rel (0) target = $region25
    $region24: #{pointnet_forward.3} parent=1 // pred_region
      _
    $region25: #{pointnet_forward.3} parent=1 // pred_fallthru
      _
    // Predicated region
    $region26: #{pointnet_forward.3} parent=1 // pred_check
      _
    $region27: #{pointnet_forward.3} parent=1 // pred_check_branch
      %31 = sbr.rel (0) target = $region29
    $region28: #{pointnet_forward.3} parent=1 // pred_region
      _
    $region29: #{pointnet_forward.3} parent=1 // pred_fallthru
      _
    // Predicated region
    $region30: #{pointnet_forward.3} parent=1 // pred_check
      _
    $region31: #{pointnet_forward.3} parent=1 // pred_check_branch
      %33 = sbr.rel (0) target = $region33
    $region32: #{pointnet_forward.3} parent=1 // pred_region
      _
    $region33: #{pointnet_forward.3} parent=1 // pred_fallthru
      _
    %p34 = scmp.eq.s32.totalorder 0, 0
    // Predicated region
    $region34: #{pointnet_forward.3} parent=1 // pred_check
      %p35 = pneg %p34
    $region35: #{pointnet_forward.3} parent=1 // pred_check_branch
      %37 = sbr.rel (%p35) target = $region37
    $region36: #{pointnet_forward.3} parent=1 // pred_region
      %v38 = vld [vmem:[%s4] sm:$0xff]
      %v39 = vld [vmem:[%s4 + $0x8] sm:$0xff]
      %v40 = vld [vmem:[%s5] sm:$0xff]
      %v41 = vld [vmem:[%s5 + $0x8] sm:$0xff]
      %v42 = vld [vmem:[%s5 + $0x10] sm:$0xff]
      %v43 = vld [vmem:[%s5 + $0x18] sm:$0xff]
      %v44 = vld [vmem:[%s5 + $0x20] sm:$0x7]
      %v45 = vld [vmem:[%s7] sm:$0x1]
      %v47 = vlaneseq
      %v48 = vshrl.u32 %v47, 7
      %v49 = vsub.s32 0, %v48
      %v50 = vrot.slane %v45, %v49
      %vm52 = vcmask 285696
      %v54 = vsel %vm52, %v38, 0
      %v57 = vsel %vm52, %v39, 0
      %vm59 = vcmask 1042432
      %v61 = vsel %vm59, %v44, 0
      %63 = vmatprep.subr.mxu0 0.0
      %64 = vmatpush1.msra.mxu0 %v40
      %65 = vmatprep.subr.mxu0 0.0
      %66 = vmatpush1.msra.mxu0 %v41
      %67 = vmatprep.subr.mxu0 0.0
      %68 = vmatpush1.msra.mxu0 %v42
      %69 = vmatprep.subr.mxu0 0.0
      %70 = vmatpush1.msra.mxu0 %v43
      %71 = vmatprep.subr.mxu0 0.0
      %72 = vmatpush1.msra.mxu0 %v61
      %73 = vmatprep.subr.mxu0 0.0
      %74 = vmatpush1.msra.mxu0 0.0
      %75 = vmatprep.subr.mxu0 0.0
      %76 = vmatpush1.msra.mxu0 0.0
      %77 = vmatprep.subr.mxu0 0.0
      %78 = vmatpush1.msra.mxu0 0.0
      %79 = vmatprep.subr.mxu0 0.0
      %80 = vmatpush1.msra.mxu0 0.0
      %81 = vmatprep.subr.mxu0 0.0
      %82 = vmatpush1.msra.mxu0 0.0
      %83 = vmatprep.subr.mxu0 0.0
      %84 = vmatpush1.msra.mxu0 0.0
      %85 = vmatprep.subr.mxu0 0.0
      %86 = vmatpush1.msra.mxu0 0.0
      %87 = vmatprep.subr.mxu0 0.0
      %88 = vmatpush1.msra.mxu0 0.0
      %89 = vmatprep.subr.mxu0 0.0
      %90 = vmatpush1.msra.mxu0 0.0
      %91 = vmatprep.subr.mxu0 0.0
      %92 = vmatpush1.msra.mxu0 0.0
      %93 = vmatprep.subr.mxu0 0.0
      %94 = vmatpush1.msra.mxu0 0.0
      %95 = vmatprep.subr.mxu0 0.0
      %96 = vmatpush1.msra.mxu0 0.0
      %97 = vmatprep.subr.mxu0 0.0
      %98 = vmatpush1.msra.mxu0 0.0
      %99 = vmatprep.subr.mxu0 0.0
      %100 = vmatpush1.msra.mxu0 0.0
      %101 = vmatprep.subr.mxu0 0.0
      %102 = vmatpush1.msra.mxu0 0.0
      %103 = vmatprep.subr.mxu0 0.0
      %104 = vmatpush1.msra.mxu0 0.0
      %105 = vmatprep.subr.mxu0 0.0
      %106 = vmatpush1.msra.mxu0 0.0
      %107 = vmatprep.subr.mxu0 0.0
      %108 = vmatpush1.msra.mxu0 0.0
      %109 = vmatprep.subr.mxu0 0.0
      %110 = vmatpush1.msra.mxu0 0.0
      %111 = vmatprep.subr.mxu0 0.0
      %112 = vmatpush1.msra.mxu0 0.0
      %113 = vmatprep.subr.mxu0 0.0
      %114 = vmatpush1.msra.mxu0 0.0
      %115 = vmatprep.subr.mxu0 0.0
      %116 = vmatpush1.msra.mxu0 0.0
      %117 = vmatprep.subr.mxu0 0.0
      %118 = vmatpush1.msra.mxu0 0.0
      %119 = vmatprep.subr.mxu0 0.0
      %120 = vmatpush1.msra.mxu0 0.0
      %121 = vmatprep.subr.mxu0 0.0
      %122 = vmatpush1.msra.mxu0 0.0
      %123 = vmatprep.subr.mxu0 0.0
      %124 = vmatpush1.msra.mxu0 0.0
      %125 = vmatprep.subr.mxu0 0.0
      %126 = vmatpush1.msra.mxu0 0.0
      %127 = vmatprep.mubr.f32.mxu0 0.0
      %128 = vmatmul.mubr.f32.gmra.mrb[0].mxu0 %v54
      %v129 = vpop.f32.mrb[0].mxu0
      %v130 = vadd.f32 %v50, %v129
      %v131 = vpop.f32.mrb[0].mxu0
      %132 = vmatprep.mubr.f32.mxu0 0.0
      %133 = vmatmul.mubr.f32.gmra.mrb[0].mxu0 %v57
      %v134 = vpop.f32.mrb[0].mxu0
      %v135 = vadd.f32 %v50, %v134
      %v136 = vpop.f32.mrb[0].mxu0
      %137 = vdwg.mxu0
      %138 = vst [vmem:[#allocation2] sm:$0xff] %v130
      %139 = vst [vmem:[#allocation2 + $0x8] sm:$0xff] %v135
      %v140 = vld [vmem:[%s6] sm:$0xff]
      %v141 = vld [vmem:[%s6 + $0x8] sm:$0xff]
      %v142 = vld [vmem:[%s6 + $0x10] sm:$0xff]
      %v143 = vld [vmem:[%s6 + $0x18] sm:$0xff]
      %v144 = vld [vmem:[%s6 + $0x20] sm:$0x7]
      %v146 = vsel %vm59, %v144, 0
      %148 = vmatprep.subr.mxu0 0.0
      %149 = vmatpush1.msra.mxu0 %v140
      %150 = vmatprep.subr.mxu0 0.0
      %151 = vmatpush1.msra.mxu0 %v141
      %152 = vmatprep.subr.mxu0 0.0
      %153 = vmatpush1.msra.mxu0 %v142
      %154 = vmatprep.subr.mxu0 0.0
      %155 = vmatpush1.msra.mxu0 %v143
      %156 = vmatprep.subr.mxu0 0.0
      %157 = vmatpush1.msra.mxu0 %v146
      %158 = vmatprep.subr.mxu0 0.0
      %159 = vmatpush1.msra.mxu0 0.0
      %160 = vmatprep.subr.mxu0 0.0
      %161 = vmatpush1.msra.mxu0 0.0
      %162 = vmatprep.subr.mxu0 0.0
      %163 = vmatpush1.msra.mxu0 0.0
      %164 = vmatprep.subr.mxu0 0.0
      %165 = vmatpush1.msra.mxu0 0.0
      %166 = vmatprep.subr.mxu0 0.0
      %167 = vmatpush1.msra.mxu0 0.0
      %168 = vmatprep.subr.mxu0 0.0
      %169 = vmatpush1.msra.mxu0 0.0
      %170 = vmatprep.subr.mxu0 0.0
      %171 = vmatpush1.msra.mxu0 0.0
      %172 = vmatprep.subr.mxu0 0.0
      %173 = vmatpush1.msra.mxu0 0.0
      %174 = vmatprep.subr.mxu0 0.0
      %175 = vmatpush1.msra.mxu0 0.0
      %176 = vmatprep.subr.mxu0 0.0
      %177 = vmatpush1.msra.mxu0 0.0
      %178 = vmatprep.subr.mxu0 0.0
      %179 = vmatpush1.msra.mxu0 0.0
      %180 = vmatprep.subr.mxu0 0.0
      %181 = vmatpush1.msra.mxu0 0.0
      %182 = vmatprep.subr.mxu0 0.0
      %183 = vmatpush1.msra.mxu0 0.0
      %184 = vmatprep.subr.mxu0 0.0
      %185 = vmatpush1.msra.mxu0 0.0
      %186 = vmatprep.subr.mxu0 0.0
      %187 = vmatpush1.msra.mxu0 0.0
      %188 = vmatprep.subr.mxu0 0.0
      %189 = vmatpush1.msra.mxu0 0.0
      %190 = vmatprep.subr.mxu0 0.0
      %191 = vmatpush1.msra.mxu0 0.0
      %192 = vmatprep.subr.mxu0 0.0
      %193 = vmatpush1.msra.mxu0 0.0
      %194 = vmatprep.subr.mxu0 0.0
      %195 = vmatpush1.msra.mxu0 0.0
      %196 = vmatprep.subr.mxu0 0.0
      %197 = vmatpush1.msra.mxu0 0.0
      %198 = vmatprep.subr.mxu0 0.0
      %199 = vmatpush1.msra.mxu0 0.0
      %200 = vmatprep.subr.mxu0 0.0
      %201 = vmatpush1.msra.mxu0 0.0
      %202 = vmatprep.subr.mxu0 0.0
      %203 = vmatpush1.msra.mxu0 0.0
      %204 = vmatprep.subr.mxu0 0.0
      %205 = vmatpush1.msra.mxu0 0.0
      %206 = vmatprep.subr.mxu0 0.0
      %207 = vmatpush1.msra.mxu0 0.0
      %208 = vmatprep.subr.mxu0 0.0
      %209 = vmatpush1.msra.mxu0 0.0
      %210 = vmatprep.subr.mxu0 0.0
      %211 = vmatpush1.msra.mxu0 0.0
      %212 = vmatprep.mubr.f32.mxu0 0.0
      %213 = vmatmul.mubr.f32.gmra.mrb[0].mxu0 %v54
      %v214 = vpop.f32.mrb[0].mxu0
      %v215 = vadd.f32 0.0, %v214
      %v216 = vpop.f32.mrb[0].mxu0
      %217 = vmatprep.mubr.f32.mxu0 0.0
      %218 = vmatmul.mubr.f32.gmra.mrb[0].mxu0 %v57
      %v219 = vpop.f32.mrb[0].mxu0
      %v220 = vadd.f32 0.0, %v219
      %v221 = vpop.f32.mrb[0].mxu0
      %222 = vdwg.mxu0
      %223 = vst [vmem:[#allocation3] sm:$0xff] %v215
      %224 = vst [vmem:[#allocation3 + $0x8] sm:$0xff] %v220
      %225 = vst [vmem:[#allocation7] sm:$0xff] -inf
      %226 = vst [vmem:[#allocation7 + $0x8] sm:$0xff] -inf
    $region37: #{pointnet_forward.3} parent=1 // pred_fallthru
      _
    %v227 = vld [vmem:[%s2] sm:$0xff]
    %v228 = vld [vmem:[%s2 + $0x8] sm:$0xff]
    %v229 = vld [vmem:[%s2 + $0x10] sm:$0xff]
    %v230 = vld [vmem:[%s2 + $0x18] sm:$0xff]
    %v231 = vld [vmem:[%s3] sm:$0xff]
    %v232 = vld [vmem:[%s3 + $0x8] sm:$0xff]
    %v233 = vld [vmem:[%s3 + $0x10] sm:$0xff]
    %v234 = vld [vmem:[%s3 + $0x18] sm:$0xff]
    %v235 = vlaneseq
    %v236 = vand.u32 %v235, 127
    %237 = vset.pattern.permute.xlu0 0
    %238 = vperm.xlu0 %237, %v227
    %v239 = vpop.permute.xlu0 %238
    %240 = vset.pattern.permute.xlu0 0
    %241 = vperm.xlu0 %240, %v228
    %v242 = vpop.permute.xlu0 %241
    %243 = vset.pattern.permute.xlu0 0
    %244 = vperm.xlu0 %243, %v229
    %v245 = vpop.permute.xlu0 %244
    %246 = vset.pattern.permute.xlu0 0
    %247 = vperm.xlu0 %246, %v230
    %v248 = vpop.permute.xlu0 %247
    %vm249 = vcmp.eq.s32.totalorder %v236, %v239
    %vm250 = vcmp.eq.s32.totalorder %v236, %v242
    %vm251 = vcmp.eq.s32.totalorder %v236, %v245
    %vm252 = vcmp.eq.s32.totalorder %v236, %v248
    %v253 = vsel %vm249, 1, 0
    %v254 = vsel %vm250, 1, 0
    %v255 = vsel %vm251, 1, 0
    %v256 = vsel %vm252, 1, 0
    %v257 = vcvt.s32.f32 %v253
    %v258 = vcvt.s32.f32 %v254
    %v259 = vcvt.s32.f32 %v255
    %v260 = vcvt.s32.f32 %v256
    %261 = vset.pattern.permute.xlu0 0
    %262 = vperm.xlu0 %261, %v231
    %v263 = vpop.permute.xlu0 %262
    %264 = vset.pattern.permute.xlu0 0
    %265 = vperm.xlu0 %264, %v232
    %v266 = vpop.permute.xlu0 %265
    %267 = vset.pattern.permute.xlu0 0
    %268 = vperm.xlu0 %267, %v233
    %v269 = vpop.permute.xlu0 %268
    %270 = vset.pattern.permute.xlu0 0
    %271 = vperm.xlu0 %270, %v234
    %v272 = vpop.permute.xlu0 %271
    %vm273 = vcmp.eq.s32.totalorder %v236, %v263
    %vm274 = vcmp.eq.s32.totalorder %v236, %v266
    %vm275 = vcmp.eq.s32.totalorder %v236, %v269
    %vm276 = vcmp.eq.s32.totalorder %v236, %v272
    %v277 = vsel %vm273, 1, 0
    %v278 = vsel %vm274, 1, 0
    %v279 = vsel %vm275, 1, 0
    %v280 = vsel %vm276, 1, 0
    %v281 = vcvt.s32.f32 %v277
    %v282 = vcvt.s32.f32 %v278
    %v283 = vcvt.s32.f32 %v279
    %v284 = vcvt.s32.f32 %v280
    %v285 = vld [vmem:[#allocation2] sm:$0xff]
    %v286 = vld [vmem:[#allocation2 + $0x8] sm:$0xff]
    %vm287 = vcmask 130048
    %v289 = vsel %vm287, %v257, 0
    %v292 = vsel %vm287, %v258, 0
    %v295 = vsel %vm287, %v259, 0
    %v298 = vsel %vm287, %v260, 0
    %300 = vmatprep.subr.mxu0 0.0
    %301 = vmatpush1.msra.mxu0 %v285
    %302 = vmatprep.subr.mxu0 0.0
    %303 = vmatpush1.msra.mxu0 %v286
    %304 = vmatprep.subr.mxu0 0.0
    %305 = vmatpush1.msra.mxu0 0.0
    %306 = vmatprep.subr.mxu0 0.0
    %307 = vmatpush1.msra.mxu0 0.0
    %308 = vmatprep.subr.mxu0 0.0
    %309 = vmatpush1.msra.mxu0 0.0
    %310 = vmatprep.subr.mxu0 0.0
    %311 = vmatpush1.msra.mxu0 0.0
    %312 = vmatprep.subr.mxu0 0.0
    %313 = vmatpush1.msra.mxu0 0.0
    %314 = vmatprep.subr.mxu0 0.0
    %315 = vmatpush1.msra.mxu0 0.0
    %316 = vmatprep.subr.mxu0 0.0
    %317 = vmatpush1.msra.mxu0 0.0
    %318 = vmatprep.subr.mxu0 0.0
    %319 = vmatpush1.msra.mxu0 0.0
    %320 = vmatprep.subr.mxu0 0.0
    %321 = vmatpush1.msra.mxu0 0.0
    %322 = vmatprep.subr.mxu0 0.0
    %323 = vmatpush1.msra.mxu0 0.0
    %324 = vmatprep.subr.mxu0 0.0
    %325 = vmatpush1.msra.mxu0 0.0
    %326 = vmatprep.subr.mxu0 0.0
    %327 = vmatpush1.msra.mxu0 0.0
    %328 = vmatprep.subr.mxu0 0.0
    %329 = vmatpush1.msra.mxu0 0.0
    %330 = vmatprep.subr.mxu0 0.0
    %331 = vmatpush1.msra.mxu0 0.0
    %332 = vmatprep.subr.mxu0 0.0
    %333 = vmatpush1.msra.mxu0 0.0
    %334 = vmatprep.subr.mxu0 0.0
    %335 = vmatpush1.msra.mxu0 0.0
    %336 = vmatprep.subr.mxu0 0.0
    %337 = vmatpush1.msra.mxu0 0.0
    %338 = vmatprep.subr.mxu0 0.0
    %339 = vmatpush1.msra.mxu0 0.0
    %340 = vmatprep.subr.mxu0 0.0
    %341 = vmatpush1.msra.mxu0 0.0
    %342 = vmatprep.subr.mxu0 0.0
    %343 = vmatpush1.msra.mxu0 0.0
    %344 = vmatprep.subr.mxu0 0.0
    %345 = vmatpush1.msra.mxu0 0.0
    %346 = vmatprep.subr.mxu0 0.0
    %347 = vmatpush1.msra.mxu0 0.0
    %348 = vmatprep.subr.mxu0 0.0
    %349 = vmatpush1.msra.mxu0 0.0
    %350 = vmatprep.subr.mxu0 0.0
    %351 = vmatpush1.msra.mxu0 0.0
    %352 = vmatprep.subr.mxu0 0.0
    %353 = vmatpush1.msra.mxu0 0.0
    %354 = vmatprep.subr.mxu0 0.0
    %355 = vmatpush1.msra.mxu0 0.0
    %356 = vmatprep.subr.mxu0 0.0
    %357 = vmatpush1.msra.mxu0 0.0
    %358 = vmatprep.subr.mxu0 0.0
    %359 = vmatpush1.msra.mxu0 0.0
    %360 = vmatprep.subr.mxu0 0.0
    %361 = vmatpush1.msra.mxu0 0.0
    %362 = vmatprep.subr.mxu0 0.0
    %363 = vmatpush1.msra.mxu0 0.0
    %364 = vmatprep.mubr.f32.mxu0 0.0
    %365 = vmatmul.mubr.f32.gmra.mrb[0].mxu0 %v289
    %v366 = vpop.f32.mrb[0].mxu0
    %v367 = vadd.f32 0.0, %v366
    %v368 = vpop.f32.mrb[0].mxu0
    %369 = vmatprep.mubr.f32.mxu0 0.0
    %370 = vmatmul.mubr.f32.gmra.mrb[0].mxu0 %v292
    %v371 = vpop.f32.mrb[0].mxu0
    %v372 = vadd.f32 0.0, %v371
    %v373 = vpop.f32.mrb[0].mxu0
    %374 = vmatprep.mubr.f32.mxu0 0.0
    %375 = vmatmul.mubr.f32.gmra.mrb[0].mxu0 %v295
    %v376 = vpop.f32.mrb[0].mxu0
    %v377 = vadd.f32 0.0, %v376
    %v378 = vpop.f32.mrb[0].mxu0
    %379 = vmatprep.mubr.f32.mxu0 0.0
    %380 = vmatmul.mubr.f32.gmra.mrb[0].mxu0 %v298
    %v381 = vpop.f32.mrb[0].mxu0
    %v382 = vadd.f32 0.0, %v381
    %v383 = vpop.f32.mrb[0].mxu0
    %384 = vdwg.mxu0
    %v385 = vld [vmem:[#allocation3] sm:$0xff]
    %v386 = vld [vmem:[#allocation3 + $0x8] sm:$0xff]
    %v388 = vsel %vm287, %v281, 0
    %v391 = vsel %vm287, %v282, 0
    %v394 = vsel %vm287, %v283, 0
    %v397 = vsel %vm287, %v284, 0
    %399 = vmatprep.subr.mxu0 0.0
    %400 = vmatpush1.msra.mxu0 %v385
    %401 = vmatprep.subr.mxu0 0.0
    %402 = vmatpush1.msra.mxu0 %v386
    %403 = vmatprep.subr.mxu0 0.0
    %404 = vmatpush1.msra.mxu0 0.0
    %405 = vmatprep.subr.mxu0 0.0
    %406 = vmatpush1.msra.mxu0 0.0
    %407 = vmatprep.subr.mxu0 0.0
    %408 = vmatpush1.msra.mxu0 0.0
    %409 = vmatprep.subr.mxu0 0.0
    %410 = vmatpush1.msra.mxu0 0.0
    %411 = vmatprep.subr.mxu0 0.0
    %412 = vmatpush1.msra.mxu0 0.0
    %413 = vmatprep.subr.mxu0 0.0
    %414 = vmatpush1.msra.mxu0 0.0
    %415 = vmatprep.subr.mxu0 0.0
    %416 = vmatpush1.msra.mxu0 0.0
    %417 = vmatprep.subr.mxu0 0.0
    %418 = vmatpush1.msra.mxu0 0.0
    %419 = vmatprep.subr.mxu0 0.0
    %420 = vmatpush1.msra.mxu0 0.0
    %421 = vmatprep.subr.mxu0 0.0
    %422 = vmatpush1.msra.mxu0 0.0
    %423 = vmatprep.subr.mxu0 0.0
    %424 = vmatpush1.msra.mxu0 0.0
    %425 = vmatprep.subr.mxu0 0.0
    %426 = vmatpush1.msra.mxu0 0.0
    %427 = vmatprep.subr.mxu0 0.0
    %428 = vmatpush1.msra.mxu0 0.0
    %429 = vmatprep.subr.mxu0 0.0
    %430 = vmatpush1.msra.mxu0 0.0
    %431 = vmatprep.subr.mxu0 0.0
    %432 = vmatpush1.msra.mxu0 0.0
    %433 = vmatprep.subr.mxu0 0.0
    %434 = vmatpush1.msra.mxu0 0.0
    %435 = vmatprep.subr.mxu0 0.0
    %436 = vmatpush1.msra.mxu0 0.0
    %437 = vmatprep.subr.mxu0 0.0
    %438 = vmatpush1.msra.mxu0 0.0
    %439 = vmatprep.subr.mxu0 0.0
    %440 = vmatpush1.msra.mxu0 0.0
    %441 = vmatprep.subr.mxu0 0.0
    %442 = vmatpush1.msra.mxu0 0.0
    %443 = vmatprep.subr.mxu0 0.0
    %444 = vmatpush1.msra.mxu0 0.0
    %445 = vmatprep.subr.mxu0 0.0
    %446 = vmatpush1.msra.mxu0 0.0
    %447 = vmatprep.subr.mxu0 0.0
    %448 = vmatpush1.msra.mxu0 0.0
    %449 = vmatprep.subr.mxu0 0.0
    %450 = vmatpush1.msra.mxu0 0.0
    %451 = vmatprep.subr.mxu0 0.0
    %452 = vmatpush1.msra.mxu0 0.0
    %453 = vmatprep.subr.mxu0 0.0
    %454 = vmatpush1.msra.mxu0 0.0
    %455 = vmatprep.subr.mxu0 0.0
    %456 = vmatpush1.msra.mxu0 0.0
    %457 = vmatprep.subr.mxu0 0.0
    %458 = vmatpush1.msra.mxu0 0.0
    %459 = vmatprep.subr.mxu0 0.0
    %460 = vmatpush1.msra.mxu0 0.0
    %461 = vmatprep.subr.mxu0 0.0
    %462 = vmatpush1.msra.mxu0 0.0
    %463 = vmatprep.mubr.f32.mxu0 0.0
    %464 = vmatmul.mubr.f32.gmra.mrb[0].mxu0 %v388
    %v465 = vpop.f32.mrb[0].mxu0
    %v466 = vadd.f32 0.0, %v465
    %v467 = vpop.f32.mrb[0].mxu0
    %468 = vmatprep.mubr.f32.mxu0 0.0
    %469 = vmatmul.mubr.f32.gmra.mrb[0].mxu0 %v391
    %v470 = vpop.f32.mrb[0].mxu0
    %v471 = vadd.f32 0.0, %v470
    %v472 = vpop.f32.mrb[0].mxu0
    %473 = vmatprep.mubr.f32.mxu0 0.0
    %474 = vmatmul.mubr.f32.gmra.mrb[0].mxu0 %v394
    %v475 = vpop.f32.mrb[0].mxu0
    %v476 = vadd.f32 0.0, %v475
    %v477 = vpop.f32.mrb[0].mxu0
    %478 = vmatprep.mubr.f32.mxu0 0.0
    %479 = vmatmul.mubr.f32.gmra.mrb[0].mxu0 %v397
    %v480 = vpop.f32.mrb[0].mxu0
    %v481 = vadd.f32 0.0, %v480
    %v482 = vpop.f32.mrb[0].mxu0
    %483 = vdwg.mxu0
    %v484 = vsub.f32 %v367, %v466
    %v485 = vsub.f32 %v372, %v471
    %v486 = vsub.f32 %v377, %v476
    %v487 = vsub.f32 %v382, %v481
    %v488 = vmax.f32 %v484, 0.0
    %v489 = vmax.f32 %v485, 0.0
    %v490 = vmax.f32 %v486, 0.0
    %v491 = vmax.f32 %v487, 0.0
    %v492 = vld [vmem:[%s9] sm:$0xff]
    %v493 = vld [vmem:[%s9 + $0x8] sm:$0xff]
    %v494 = vld [vmem:[%s9 + $0x10] sm:$0xff]
    %v495 = vld [vmem:[%s9 + $0x18] sm:$0xff]
    %v496 = vld [vmem:[%s9 + $0x20] sm:$0xff]
    %v497 = vld [vmem:[%s9 + $0x28] sm:$0xff]
    %v498 = vld [vmem:[%s9 + $0x30] sm:$0xff]
    %v499 = vld [vmem:[%s9 + $0x38] sm:$0xff]
    %v500 = vld [vmem:[%s9 + $0x40] sm:$0xff]
    %v501 = vld [vmem:[%s9 + $0x48] sm:$0xff]
    %v502 = vld [vmem:[%s9 + $0x50] sm:$0xff]
    %v503 = vld [vmem:[%s9 + $0x58] sm:$0xff]
    %v504 = vld [vmem:[%s9 + $0x60] sm:$0xff]
    %v505 = vld [vmem:[%s9 + $0x68] sm:$0xff]
    %v506 = vld [vmem:[%s9 + $0x70] sm:$0xff]
    %v507 = vld [vmem:[%s9 + $0x78] sm:$0xff]
    %508 = vmatprep.subr.mxu0 0.0
    %509 = vmatpush1.msra.mxu0 %v492
    %510 = vmatprep.subr.mxu0 0.0
    %511 = vmatpush1.msra.mxu0 %v493
    %512 = vmatprep.subr.mxu0 0.0
    %513 = vmatpush1.msra.mxu0 %v494
    %514 = vmatprep.subr.mxu0 0.0
    %515 = vmatpush1.msra.mxu0 %v495
    %516 = vmatprep.subr.mxu0 0.0
    %517 = vmatpush1.msra.mxu0 %v496
    %518 = vmatprep.subr.mxu0 0.0
    %519 = vmatpush1.msra.mxu0 %v497
    %520 = vmatprep.subr.mxu0 0.0
    %521 = vmatpush1.msra.mxu0 %v498
    %522 = vmatprep.subr.mxu0 0.0
    %523 = vmatpush1.msra.mxu0 %v499
    %524 = vmatprep.subr.mxu0 0.0
    %525 = vmatpush1.msra.mxu0 %v500
    %526 = vmatprep.subr.mxu0 0.0
    %527 = vmatpush1.msra.mxu0 %v501
    %528 = vmatprep.subr.mxu0 0.0
    %529 = vmatpush1.msra.mxu0 %v502
    %530 = vmatprep.subr.mxu0 0.0
    %531 = vmatpush1.msra.mxu0 %v503
    %532 = vmatprep.subr.mxu0 0.0
    %533 = vmatpush1.msra.mxu0 %v504
    %534 = vmatprep.subr.mxu0 0.0
    %535 = vmatpush1.msra.mxu0 %v505
    %536 = vmatprep.subr.mxu0 0.0
    %537 = vmatpush1.msra.mxu0 %v506
    %538 = vmatprep.subr.mxu0 0.0
    %539 = vmatpush1.msra.mxu0 %v507
    %540 = vmatprep.subr.mxu0 0.0
    %541 = vmatpush1.msra.mxu0 0.0
    %542 = vmatprep.subr.mxu0 0.0
    %543 = vmatpush1.msra.mxu0 0.0
    %544 = vmatprep.subr.mxu0 0.0
    %545 = vmatpush1.msra.mxu0 0.0
    %546 = vmatprep.subr.mxu0 0.0
    %547 = vmatpush1.msra.mxu0 0.0
    %548 = vmatprep.subr.mxu0 0.0
    %549 = vmatpush1.msra.mxu0 0.0
    %550 = vmatprep.subr.mxu0 0.0
    %551 = vmatpush1.msra.mxu0 0.0
    %552 = vmatprep.subr.mxu0 0.0
    %553 = vmatpush1.msra.mxu0 0.0
    %554 = vmatprep.subr.mxu0 0.0
    %555 = vmatpush1.msra.mxu0 0.0
    %556 = vmatprep.subr.mxu0 0.0
    %557 = vmatpush1.msra.mxu0 0.0
    %558 = vmatprep.subr.mxu0 0.0
    %559 = vmatpush1.msra.mxu0 0.0
    %560 = vmatprep.subr.mxu0 0.0
    %561 = vmatpush1.msra.mxu0 0.0
    %562 = vmatprep.subr.mxu0 0.0
    %563 = vmatpush1.msra.mxu0 0.0
    %564 = vmatprep.subr.mxu0 0.0
    %565 = vmatpush1.msra.mxu0 0.0
    %566 = vmatprep.subr.mxu0 0.0
    %567 = vmatpush1.msra.mxu0 0.0
    %568 = vmatprep.subr.mxu0 0.0
    %569 = vmatpush1.msra.mxu0 0.0
    %570 = vmatprep.subr.mxu0 0.0
    %571 = vmatpush1.msra.mxu0 0.0
    %572 = vmatprep.mubr.f32.mxu0 0.0
    %573 = vmatmul.mubr.f32.gmra.mrb[0].mxu0 %v488
    %v574 = vpop.f32.mrb[0].mxu0
    %v575 = vadd.f32 0.0, %v574
    %v576 = vpop.f32.mrb[0].mxu0
    %577 = vmatprep.mubr.f32.mxu0 0.0
    %578 = vmatmul.mubr.f32.gmra.mrb[0].mxu0 %v489
    %v579 = vpop.f32.mrb[0].mxu0
    %v580 = vadd.f32 0.0, %v579
    %v581 = vpop.f32.mrb[0].mxu0
    %582 = vmatprep.mubr.f32.mxu0 0.0
    %583 = vmatmul.mubr.f32.gmra.mrb[0].mxu0 %v490
    %v584 = vpop.f32.mrb[0].mxu0
    %v585 = vadd.f32 0.0, %v584
    %v586 = vpop.f32.mrb[0].mxu0
    %587 = vmatprep.mubr.f32.mxu0 0.0
    %588 = vmatmul.mubr.f32.gmra.mrb[0].mxu0 %v491
    %v589 = vpop.f32.mrb[0].mxu0
    %v590 = vadd.f32 0.0, %v589
    %v591 = vpop.f32.mrb[0].mxu0
    %592 = vdwg.mxu0
    %s593 = sld [smem:[#allocation5]]
    %s594 = sld [smem:[#allocation6]]
    // While loop
    $region38: #{pointnet_forward.3} parent=1 // loop_pre_header
      _
    $region39: #{pointnet_forward.3} parent=1 // loop_header
      %s596 = sphi 0, %s598
      %p597 = scmp.ge.s32.totalorder %s596, %s594
    $region40: #{pointnet_forward.3} parent=1 // loop_header_branch
      %600 = sbr.rel (%p597) target = $region44
    $region41: #{pointnet_forward.3} parent=1 // loop_body
      %s601 = sadd.s32 %s593, %s596
      %s602 = smul.u32 %s601, 8
      %v603 = vstv %s602
      %vm604 = vcmp.eq.s32.totalorder %v231, %v603
      %vm605 = vcmp.eq.s32.totalorder %v232, %v603
      %vm606 = vcmp.eq.s32.totalorder %v233, %v603
      %vm607 = vcmp.eq.s32.totalorder %v234, %v603
      %v608 = vsel %vm604, 1, 0
      %v609 = vsel %vm605, 1, 0
      %v610 = vsel %vm606, 1, 0
      %v611 = vsel %vm607, 1, 0
      %612 = vset.pattern.permute.xlu0 0
      %613 = vperm.xlu0 %612, %v608
      %v614 = vpop.permute.xlu0 %613
      %615 = vset.pattern.permute.xlu0 0
      %616 = vperm.xlu0 %615, %v609
      %v617 = vpop.permute.xlu0 %616
      %618 = vset.pattern.permute.xlu0 0
      %619 = vperm.xlu0 %618, %v610
      %v620 = vpop.permute.xlu0 %619
      %621 = vset.pattern.permute.xlu0 0
      %622 = vperm.xlu0 %621, %v611
      %v623 = vpop.permute.xlu0 %622
      %vm624 = vcmp.eq.s32.totalorder %v614, 1
      %vm625 = vcmp.eq.s32.totalorder %v617, 1
      %vm626 = vcmp.eq.s32.totalorder %v620, 1
      %vm627 = vcmp.eq.s32.totalorder %v623, 1
      %v628 = vsel %vm624, %v575, -inf
      %v629 = vsel %vm625, %v580, -inf
      %v630 = vsel %vm626, %v585, -inf
      %v631 = vsel %vm627, %v590, -inf
      %v632 = vmax.f32 %v628, %v629
      %v633 = vmax.f32 %v630, %v631
      %v634 = vmax.f32 %v632, %v633
      %v635 = vrot.slane %v634, 4
      %v636 = vmax.f32 %v634, %v635
      %v637 = vrot.slane %v636, 2
      %v638 = vmax.f32 %v636, %v637
      %v639 = vrot.slane %v638, 1
      %v640 = vmax.f32 %v638, %v639
      %s641 = sadd.s32 %s602, 1
      %v642 = vstv %s641
      %vm643 = vcmp.eq.s32.totalorder %v231, %v642
      %vm644 = vcmp.eq.s32.totalorder %v232, %v642
      %vm645 = vcmp.eq.s32.totalorder %v233, %v642
      %vm646 = vcmp.eq.s32.totalorder %v234, %v642
      %v647 = vsel %vm643, 1, 0
      %v648 = vsel %vm644, 1, 0
      %v649 = vsel %vm645, 1, 0
      %v650 = vsel %vm646, 1, 0
      %651 = vset.pattern.permute.xlu0 0
      %652 = vperm.xlu0 %651, %v647
      %v653 = vpop.permute.xlu0 %652
      %654 = vset.pattern.permute.xlu0 0
      %655 = vperm.xlu0 %654, %v648
      %v656 = vpop.permute.xlu0 %655
      %657 = vset.pattern.permute.xlu0 0
      %658 = vperm.xlu0 %657, %v649
      %v659 = vpop.permute.xlu0 %658
      %660 = vset.pattern.permute.xlu0 0
      %661 = vperm.xlu0 %660, %v650
      %v662 = vpop.permute.xlu0 %661
      %vm663 = vcmp.eq.s32.totalorder %v653, 1
      %vm664 = vcmp.eq.s32.totalorder %v656, 1
      %vm665 = vcmp.eq.s32.totalorder %v659, 1
      %vm666 = vcmp.eq.s32.totalorder %v662, 1
      %v667 = vsel %vm663, %v575, -inf
      %v668 = vsel %vm664, %v580, -inf
      %v669 = vsel %vm665, %v585, -inf
      %v670 = vsel %vm666, %v590, -inf
      %v671 = vmax.f32 %v667, %v668
      %v672 = vmax.f32 %v669, %v670
      %v673 = vmax.f32 %v671, %v672
      %v674 = vrot.slane %v673, 4
      %v675 = vmax.f32 %v673, %v674
      %v676 = vrot.slane %v675, 2
      %v677 = vmax.f32 %v675, %v676
      %v678 = vrot.slane %v677, 1
      %v679 = vmax.f32 %v677, %v678
      %s680 = sadd.s32 %s602, 2
      %v681 = vstv %s680
      %vm682 = vcmp.eq.s32.totalorder %v231, %v681
      %vm683 = vcmp.eq.s32.totalorder %v232, %v681
      %vm684 = vcmp.eq.s32.totalorder %v233, %v681
      %vm685 = vcmp.eq.s32.totalorder %v234, %v681
      %v686 = vsel %vm682, 1, 0
      %v687 = vsel %vm683, 1, 0
      %v688 = vsel %vm684, 1, 0
      %v689 = vsel %vm685, 1, 0
      %690 = vset.pattern.permute.xlu0 0
      %691 = vperm.xlu0 %690, %v686
      %v692 = vpop.permute.xlu0 %691
      %693 = vset.pattern.permute.xlu0 0
      %694 = vperm.xlu0 %693, %v687
      %v695 = vpop.permute.xlu0 %694
      %696 = vset.pattern.permute.xlu0 0
      %697 = vperm.xlu0 %696, %v688
      %v698 = vpop.permute.xlu0 %697
      %699 = vset.pattern.permute.xlu0 0
      %700 = vperm.xlu0 %699, %v689
      %v701 = vpop.permute.xlu0 %700
      %vm702 = vcmp.eq.s32.totalorder %v692, 1
      %vm703 = vcmp.eq.s32.totalorder %v695, 1
      %vm704 = vcmp.eq.s32.totalorder %v698, 1
      %vm705 = vcmp.eq.s32.totalorder %v701, 1
      %v706 = vsel %vm702, %v575, -inf
      %v707 = vsel %vm703, %v580, -inf
      %v708 = vsel %vm704, %v585, -inf
      %v709 = vsel %vm705, %v590, -inf
      %v710 = vmax.f32 %v706, %v707
      %v711 = vmax.f32 %v708, %v709
      %v712 = vmax.f32 %v710, %v711
      %v713 = vrot.slane %v712, 4
      %v714 = vmax.f32 %v712, %v713
      %v715 = vrot.slane %v714, 2
      %v716 = vmax.f32 %v714, %v715
      %v717 = vrot.slane %v716, 1
      %v718 = vmax.f32 %v716, %v717
      %s719 = sadd.s32 %s602, 3
      %v720 = vstv %s719
      %vm721 = vcmp.eq.s32.totalorder %v231, %v720
      %vm722 = vcmp.eq.s32.totalorder %v232, %v720
      %vm723 = vcmp.eq.s32.totalorder %v233, %v720
      %vm724 = vcmp.eq.s32.totalorder %v234, %v720
      %v725 = vsel %vm721, 1, 0
      %v726 = vsel %vm722, 1, 0
      %v727 = vsel %vm723, 1, 0
      %v728 = vsel %vm724, 1, 0
      %729 = vset.pattern.permute.xlu0 0
      %730 = vperm.xlu0 %729, %v725
      %v731 = vpop.permute.xlu0 %730
      %732 = vset.pattern.permute.xlu0 0
      %733 = vperm.xlu0 %732, %v726
      %v734 = vpop.permute.xlu0 %733
      %735 = vset.pattern.permute.xlu0 0
      %736 = vperm.xlu0 %735, %v727
      %v737 = vpop.permute.xlu0 %736
      %738 = vset.pattern.permute.xlu0 0
      %739 = vperm.xlu0 %738, %v728
      %v740 = vpop.permute.xlu0 %739
      %vm741 = vcmp.eq.s32.totalorder %v731, 1
      %vm742 = vcmp.eq.s32.totalorder %v734, 1
      %vm743 = vcmp.eq.s32.totalorder %v737, 1
      %vm744 = vcmp.eq.s32.totalorder %v740, 1
      %v745 = vsel %vm741, %v575, -inf
      %v746 = vsel %vm742, %v580, -inf
      %v747 = vsel %vm743, %v585, -inf
      %v748 = vsel %vm744, %v590, -inf
      %v749 = vmax.f32 %v745, %v746
      %v750 = vmax.f32 %v747, %v748
      %v751 = vmax.f32 %v749, %v750
      %v752 = vrot.slane %v751, 4
      %v753 = vmax.f32 %v751, %v752
      %v754 = vrot.slane %v753, 2
      %v755 = vmax.f32 %v753, %v754
      %v756 = vrot.slane %v755, 1
      %v757 = vmax.f32 %v755, %v756
      %s758 = sadd.s32 %s602, 4
      %v759 = vstv %s758
      %vm760 = vcmp.eq.s32.totalorder %v231, %v759
      %vm761 = vcmp.eq.s32.totalorder %v232, %v759
      %vm762 = vcmp.eq.s32.totalorder %v233, %v759
      %vm763 = vcmp.eq.s32.totalorder %v234, %v759
      %v764 = vsel %vm760, 1, 0
      %v765 = vsel %vm761, 1, 0
      %v766 = vsel %vm762, 1, 0
      %v767 = vsel %vm763, 1, 0
      %768 = vset.pattern.permute.xlu0 0
      %769 = vperm.xlu0 %768, %v764
      %v770 = vpop.permute.xlu0 %769
      %771 = vset.pattern.permute.xlu0 0
      %772 = vperm.xlu0 %771, %v765
      %v773 = vpop.permute.xlu0 %772
      %774 = vset.pattern.permute.xlu0 0
      %775 = vperm.xlu0 %774, %v766
      %v776 = vpop.permute.xlu0 %775
      %777 = vset.pattern.permute.xlu0 0
      %778 = vperm.xlu0 %777, %v767
      %v779 = vpop.permute.xlu0 %778
      %vm780 = vcmp.eq.s32.totalorder %v770, 1
      %vm781 = vcmp.eq.s32.totalorder %v773, 1
      %vm782 = vcmp.eq.s32.totalorder %v776, 1
      %vm783 = vcmp.eq.s32.totalorder %v779, 1
      %v784 = vsel %vm780, %v575, -inf
      %v785 = vsel %vm781, %v580, -inf
      %v786 = vsel %vm782, %v585, -inf
      %v787 = vsel %vm783, %v590, -inf
      %v788 = vmax.f32 %v784, %v785
      %v789 = vmax.f32 %v786, %v787
      %v790 = vmax.f32 %v788, %v789
      %v791 = vrot.slane %v790, 4
      %v792 = vmax.f32 %v790, %v791
      %v793 = vrot.slane %v792, 2
      %v794 = vmax.f32 %v792, %v793
      %v795 = vrot.slane %v794, 1
      %v796 = vmax.f32 %v794, %v795
      %s797 = sadd.s32 %s602, 5
      %v798 = vstv %s797
      %vm799 = vcmp.eq.s32.totalorder %v231, %v798
      %vm800 = vcmp.eq.s32.totalorder %v232, %v798
      %vm801 = vcmp.eq.s32.totalorder %v233, %v798
      %vm802 = vcmp.eq.s32.totalorder %v234, %v798
      %v803 = vsel %vm799, 1, 0
      %v804 = vsel %vm800, 1, 0
      %v805 = vsel %vm801, 1, 0
      %v806 = vsel %vm802, 1, 0
      %807 = vset.pattern.permute.xlu0 0
      %808 = vperm.xlu0 %807, %v803
      %v809 = vpop.permute.xlu0 %808
      %810 = vset.pattern.permute.xlu0 0
      %811 = vperm.xlu0 %810, %v804
      %v812 = vpop.permute.xlu0 %811
      %813 = vset.pattern.permute.xlu0 0
      %814 = vperm.xlu0 %813, %v805
      %v815 = vpop.permute.xlu0 %814
      %816 = vset.pattern.permute.xlu0 0
      %817 = vperm.xlu0 %816, %v806
      %v818 = vpop.permute.xlu0 %817
      %vm819 = vcmp.eq.s32.totalorder %v809, 1
      %vm820 = vcmp.eq.s32.totalorder %v812, 1
      %vm821 = vcmp.eq.s32.totalorder %v815, 1
      %vm822 = vcmp.eq.s32.totalorder %v818, 1
      %v823 = vsel %vm819, %v575, -inf
      %v824 = vsel %vm820, %v580, -inf
      %v825 = vsel %vm821, %v585, -inf
      %v826 = vsel %vm822, %v590, -inf
      %v827 = vmax.f32 %v823, %v824
      %v828 = vmax.f32 %v825, %v826
      %v829 = vmax.f32 %v827, %v828
      %v830 = vrot.slane %v829, 4
      %v831 = vmax.f32 %v829, %v830
      %v832 = vrot.slane %v831, 2
      %v833 = vmax.f32 %v831, %v832
      %v834 = vrot.slane %v833, 1
      %v835 = vmax.f32 %v833, %v834
      %s836 = sadd.s32 %s602, 6
      %v837 = vstv %s836
      %vm838 = vcmp.eq.s32.totalorder %v231, %v837
      %vm839 = vcmp.eq.s32.totalorder %v232, %v837
      %vm840 = vcmp.eq.s32.totalorder %v233, %v837
      %vm841 = vcmp.eq.s32.totalorder %v234, %v837
      %v842 = vsel %vm838, 1, 0
      %v843 = vsel %vm839, 1, 0
      %v844 = vsel %vm840, 1, 0
      %v845 = vsel %vm841, 1, 0
      %846 = vset.pattern.permute.xlu0 0
      %847 = vperm.xlu0 %846, %v842
      %v848 = vpop.permute.xlu0 %847
      %849 = vset.pattern.permute.xlu0 0
      %850 = vperm.xlu0 %849, %v843
      %v851 = vpop.permute.xlu0 %850
      %852 = vset.pattern.permute.xlu0 0
      %853 = vperm.xlu0 %852, %v844
      %v854 = vpop.permute.xlu0 %853
      %855 = vset.pattern.permute.xlu0 0
      %856 = vperm.xlu0 %855, %v845
      %v857 = vpop.permute.xlu0 %856
      %vm858 = vcmp.eq.s32.totalorder %v848, 1
      %vm859 = vcmp.eq.s32.totalorder %v851, 1
      %vm860 = vcmp.eq.s32.totalorder %v854, 1
      %vm861 = vcmp.eq.s32.totalorder %v857, 1
      %v862 = vsel %vm858, %v575, -inf
      %v863 = vsel %vm859, %v580, -inf
      %v864 = vsel %vm860, %v585, -inf
      %v865 = vsel %vm861, %v590, -inf
      %v866 = vmax.f32 %v862, %v863
      %v867 = vmax.f32 %v864, %v865
      %v868 = vmax.f32 %v866, %v867
      %v869 = vrot.slane %v868, 4
      %v870 = vmax.f32 %v868, %v869
      %v871 = vrot.slane %v870, 2
      %v872 = vmax.f32 %v870, %v871
      %v873 = vrot.slane %v872, 1
      %v874 = vmax.f32 %v872, %v873
      %s875 = sadd.s32 %s602, 7
      %v876 = vstv %s875
      %vm877 = vcmp.eq.s32.totalorder %v231, %v876
      %vm878 = vcmp.eq.s32.totalorder %v232, %v876
      %vm879 = vcmp.eq.s32.totalorder %v233, %v876
      %vm880 = vcmp.eq.s32.totalorder %v234, %v876
      %v881 = vsel %vm877, 1, 0
      %v882 = vsel %vm878, 1, 0
      %v883 = vsel %vm879, 1, 0
      %v884 = vsel %vm880, 1, 0
      %885 = vset.pattern.permute.xlu0 0
      %886 = vperm.xlu0 %885, %v881
      %v887 = vpop.permute.xlu0 %886
      %888 = vset.pattern.permute.xlu0 0
      %889 = vperm.xlu0 %888, %v882
      %v890 = vpop.permute.xlu0 %889
      %891 = vset.pattern.permute.xlu0 0
      %892 = vperm.xlu0 %891, %v883
      %v893 = vpop.permute.xlu0 %892
      %894 = vset.pattern.permute.xlu0 0
      %895 = vperm.xlu0 %894, %v884
      %v896 = vpop.permute.xlu0 %895
      %vm897 = vcmp.eq.s32.totalorder %v887, 1
      %vm898 = vcmp.eq.s32.totalorder %v890, 1
      %vm899 = vcmp.eq.s32.totalorder %v893, 1
      %vm900 = vcmp.eq.s32.totalorder %v896, 1
      %v901 = vsel %vm897, %v575, -inf
      %v902 = vsel %vm898, %v580, -inf
      %v903 = vsel %vm899, %v585, -inf
      %v904 = vsel %vm900, %v590, -inf
      %v905 = vmax.f32 %v901, %v902
      %v906 = vmax.f32 %v903, %v904
      %v907 = vmax.f32 %v905, %v906
      %v908 = vrot.slane %v907, 4
      %v909 = vmax.f32 %v907, %v908
      %v910 = vrot.slane %v909, 2
      %v911 = vmax.f32 %v909, %v910
      %v912 = vrot.slane %v911, 1
      %v913 = vmax.f32 %v911, %v912
      %vm914 = vcmask 1040384
      %v915 = vsel %vm914, %v640, %v679
      %vm916 = vcmask 1041408
      %v917 = vsel %vm916, %v915, %v718
      %vm918 = vcmask 1042432
      %v919 = vsel %vm918, %v917, %v757
      %vm920 = vcmask 1043456
      %v921 = vsel %vm920, %v919, %v796
      %vm922 = vcmask 1044480
      %v923 = vsel %vm922, %v921, %v835
      %vm924 = vcmask 1045504
      %v925 = vsel %vm924, %v923, %v874
      %vm926 = vcmask 1046528
      %v927 = vsel %vm926, %v925, %v913
      %s928 = scalar_lea.vmem [#allocation7], %s602
      %v929 = vld [vmem:[%s928] sm:$0xff]
      %v930 = vmax.f32 %v929, %v927
      %931 = vst [vmem:[%s928] sm:$0xff] %v930
    $region42: #{pointnet_forward.3} parent=1 // loop_footer
      %s598 = sadd.s32 %s596, 1
    $region43: #{pointnet_forward.3} parent=1 // loop_footer_branch
      %595 = sbr.rel target = $region39
    $region44: #{pointnet_forward.3} parent=1 // loop_exit
      _
    // Predicated region
    $region45: #{pointnet_forward.3} parent=1 // pred_check
      %p932 = pneg %p34
    $region46: #{pointnet_forward.3} parent=1 // pred_check_branch
      %934 = sbr.rel (%p932) target = $region48
    $region47: #{pointnet_forward.3} parent=1 // pred_region
      %v935 = vld [vmem:[#allocation7] sm:$0xff]
      %v936 = vld [vmem:[#allocation7 + $0x8] sm:$0xff]
      %v937 = vld [vmem:[%s8] sm:$0x1]
      %v939 = vlaneseq
      %v940 = vshrl.u32 %v939, 7
      %v941 = vsub.s32 0, %v940
      %v942 = vrot.slane %v937, %v941
      %v944 = vadd.f32 %v935, %v942
      %v945 = vadd.f32 %v936, %v942
      %v946 = vmax.f32 %v944, 0.0
      %v947 = vmax.f32 %v945, 0.0
      %948 = vst [vmem:[#allocation7] sm:$0xff] %v946
      %949 = vst [vmem:[#allocation7 + $0x8] sm:$0xff] %v947
    $region48: #{pointnet_forward.3} parent=1 // pred_fallthru
      _
    // Predicated region
    $region49: #{pointnet_forward.3} parent=1 // pred_check
      _
    $region50: #{pointnet_forward.3} parent=1 // pred_check_branch
      %951 = sbr.rel (0) target = $region52
    $region51: #{pointnet_forward.3} parent=1 // pred_region
      %s953 = ssub.s32 256, 256
      %954 = vsyncadd [#allocation8], %s953
      %s955 = sshll.u32 [#allocation7], 4
      %s956 = int_to_ptr.vmem [resolvable:$true] %s955
      %961 = dma.vmem_to_hbm [thread:$0]  %s956, 256, %s10, [#allocation8], 128, 128, 8
    $region52: #{pointnet_forward.3} parent=1 // pred_fallthru
      _
    // Predicated region
    $region53: #{pointnet_forward.3} parent=1 // pred_check
      _
    $region54: #{pointnet_forward.3} parent=1 // pred_check_branch
      %963 = sbr.rel (0) target = $region56
    $region55: #{pointnet_forward.3} parent=1 // pred_region
      %964 = dma.done [#allocation8], 256
    $region56: #{pointnet_forward.3} parent=1 // pred_fallthru
      _
    %965 = vsyncpa [#allocation8], 1

// kernel: pointnet_forward.2
$region0: #{pointnet_forward.2}
  #allocation0 [shape = 'u32[]', space=smem, size = 0x4, offset = 0x4, fixed_abs, tag = 'smem constant byte address 0x4 - core index']
  #allocation1 [shape = 'u32[144,128]{1,0:T(1,128)}', space=vmem, size = 0x12000, scoped, tag = 'internal scratch']
  #allocation2 [shape = 'f32[16,128]{1,0:T(8,128)}', space=vmem, size = 0x2000, scoped, tag = 'scratch operand']
  #allocation3 [shape = 'f32[16,128]{1,0:T(8,128)}', space=vmem, size = 0x2000, scoped, tag = 'scratch operand']
  #allocation4 [shape = 's32[1]{0}', space=sflag, size = 0x4, scoped, tag = 'scoped memory for pointnet_forward.2']
  #allocation5 [shape = 's32[1]{0:T(128)S(6)}', space=smem, size = 0x200, scoped, tag = 'prefetched SMEM operand 0']
  #allocation6 [shape = 's32[1]{0:T(128)S(6)}', space=smem, size = 0x200, scoped, tag = 'prefetched SMEM operand 1']
  %s0 = inlined_call_operand.<no memory space> [shape: s32[1], index: 0, kind: input, shape index: {}]
  %s1 = inlined_call_operand.<no memory space> [shape: s32[1], index: 1, kind: input, shape index: {}]
  %s2 = inlined_call_operand.vmem [shape: s32[32,1], index: 2, kind: input, shape index: {}]
  %s3 = inlined_call_operand.vmem [shape: s32[32,1], index: 3, kind: input, shape index: {}]
  %s4 = inlined_call_operand.vmem [shape: f32[16,6], index: 4, kind: input, shape index: {}]
  %s5 = inlined_call_operand.vmem [shape: f32[6,128], index: 5, kind: input, shape index: {}]
  %s6 = inlined_call_operand.vmem [shape: f32[6,128], index: 6, kind: input, shape index: {}]
  %s7 = inlined_call_operand.vmem [shape: f32[1,128], index: 7, kind: input, shape index: {}]
  %s8 = inlined_call_operand.vmem [shape: f32[1,128], index: 8, kind: input, shape index: {}]
  %s9 = inlined_call_operand.vmem [shape: f32[128,128], index: 9, kind: input, shape index: {}]
  %s10 = inlined_call_operand.vmem [shape: f32[16,128], index: 10, kind: output, shape index: {}]
  %s11 = sld [smem:[#allocation0]]
  $region57: #{pointnet_forward.2} parent=0
    _
  %s13 = ssub.s32 1, %s11
  %s14 = scalar_select 0, %s13, %s11
  %15 = sst [smem:[#allocation5]] %s0
  %16 = sst [smem:[#allocation6]] %s1
  // Predicated region
  $region2: #{pointnet_forward.2} parent=0 // pred_check
    _
  $region3: #{pointnet_forward.2} parent=0 // pred_check_branch
    %18 = sbr.rel (0) target = $region5
  $region4: #{pointnet_forward.2} parent=0 // pred_region
    _
  $region5: #{pointnet_forward.2} parent=0 // pred_fallthru
    _
  // Predicated region
  $region6: #{pointnet_forward.2} parent=0 // pred_check
    _
  $region7: #{pointnet_forward.2} parent=0 // pred_check_branch
    %20 = sbr.rel (0) target = $region9
  $region8: #{pointnet_forward.2} parent=0 // pred_region
    _
  $region9: #{pointnet_forward.2} parent=0 // pred_fallthru
    _
  // Predicated region
  $region10: #{pointnet_forward.2} parent=0 // pred_check
    _
  $region11: #{pointnet_forward.2} parent=0 // pred_check_branch
    %22 = sbr.rel (0) target = $region13
  $region12: #{pointnet_forward.2} parent=0 // pred_region
    _
  $region13: #{pointnet_forward.2} parent=0 // pred_fallthru
    _
  // Predicated region
  $region14: #{pointnet_forward.2} parent=0 // pred_check
    _
  $region15: #{pointnet_forward.2} parent=0 // pred_check_branch
    %24 = sbr.rel (0) target = $region17
  $region16: #{pointnet_forward.2} parent=0 // pred_region
    _
  $region17: #{pointnet_forward.2} parent=0 // pred_fallthru
    _
  // Predicated region
  $region18: #{pointnet_forward.2} parent=0 // pred_check
    _
  $region19: #{pointnet_forward.2} parent=0 // pred_check_branch
    %26 = sbr.rel (0) target = $region21
  $region20: #{pointnet_forward.2} parent=0 // pred_region
    _
  $region21: #{pointnet_forward.2} parent=0 // pred_fallthru
    _
  // Predicated region
  $region22: #{pointnet_forward.2} parent=0 // pred_check
    _
  $region23: #{pointnet_forward.2} parent=0 // pred_check_branch
    %28 = sbr.rel (0) target = $region25
  $region24: #{pointnet_forward.2} parent=0 // pred_region
    _
  $region25: #{pointnet_forward.2} parent=0 // pred_fallthru
    _
  // Predicated region
  $region26: #{pointnet_forward.2} parent=0 // pred_check
    _
  $region27: #{pointnet_forward.2} parent=0 // pred_check_branch
    %30 = sbr.rel (0) target = $region29
  $region28: #{pointnet_forward.2} parent=0 // pred_region
    _
  $region29: #{pointnet_forward.2} parent=0 // pred_fallthru
    _
  // Predicated region
  $region30: #{pointnet_forward.2} parent=0 // pred_check
    _
  $region31: #{pointnet_forward.2} parent=0 // pred_check_branch
    %32 = sbr.rel (0) target = $region33
  $region32: #{pointnet_forward.2} parent=0 // pred_region
    _
  $region33: #{pointnet_forward.2} parent=0 // pred_fallthru
    _
  %p33 = scmp.eq.s32.totalorder 0, 0
  // Predicated region
  $region34: #{pointnet_forward.2} parent=0 // pred_check
    %p34 = pneg %p33
  $region35: #{pointnet_forward.2} parent=0 // pred_check_branch
    %36 = sbr.rel (%p34) target = $region37
  $region36: #{pointnet_forward.2} parent=0 // pred_region
    %v37 = vld [vmem:[%s4] sm:$0xff]
    %v38 = vld [vmem:[%s4 + $0x8] sm:$0xff]
    %v39 = vld [vmem:[%s5] sm:$0x3f]
    %v40 = vld [vmem:[%s7] sm:$0x1]
    %v42 = vlaneseq
    %v43 = vshrl.u32 %v42, 7
    %v44 = vsub.s32 0, %v43
    %v45 = vrot.slane %v40, %v44
    %vm47 = vcmask 48128
    %v49 = vsel %vm47, %v37, 0
    %v52 = vsel %vm47, %v38, 0
    %vm54 = vcmask 1045504
    %v56 = vsel %vm54, %v39, 0
    %58 = vmatprep.subr.mxu0 0.0
    %59 = vmatpush1.msra.mxu0 %v56
    %60 = vmatprep.subr.mxu0 0.0
    %61 = vmatpush1.msra.mxu0 0.0
    %62 = vmatprep.subr.mxu0 0.0
    %63 = vmatpush1.msra.mxu0 0.0
    %64 = vmatprep.subr.mxu0 0.0
    %65 = vmatpush1.msra.mxu0 0.0
    %66 = vmatprep.subr.mxu0 0.0
    %67 = vmatpush1.msra.mxu0 0.0
    %68 = vmatprep.subr.mxu0 0.0
    %69 = vmatpush1.msra.mxu0 0.0
    %70 = vmatprep.subr.mxu0 0.0
    %71 = vmatpush1.msra.mxu0 0.0
    %72 = vmatprep.subr.mxu0 0.0
    %73 = vmatpush1.msra.mxu0 0.0
    %74 = vmatprep.subr.mxu0 0.0
    %75 = vmatpush1.msra.mxu0 0.0
    %76 = vmatprep.subr.mxu0 0.0
    %77 = vmatpush1.msra.mxu0 0.0
    %78 = vmatprep.subr.mxu0 0.0
    %79 = vmatpush1.msra.mxu0 0.0
    %80 = vmatprep.subr.mxu0 0.0
    %81 = vmatpush1.msra.mxu0 0.0
    %82 = vmatprep.subr.mxu0 0.0
    %83 = vmatpush1.msra.mxu0 0.0
    %84 = vmatprep.subr.mxu0 0.0
    %85 = vmatpush1.msra.mxu0 0.0
    %86 = vmatprep.subr.mxu0 0.0
    %87 = vmatpush1.msra.mxu0 0.0
    %88 = vmatprep.subr.mxu0 0.0
    %89 = vmatpush1.msra.mxu0 0.0
    %90 = vmatprep.subr.mxu0 0.0
    %91 = vmatpush1.msra.mxu0 0.0
    %92 = vmatprep.subr.mxu0 0.0
    %93 = vmatpush1.msra.mxu0 0.0
    %94 = vmatprep.subr.mxu0 0.0
    %95 = vmatpush1.msra.mxu0 0.0
    %96 = vmatprep.subr.mxu0 0.0
    %97 = vmatpush1.msra.mxu0 0.0
    %98 = vmatprep.subr.mxu0 0.0
    %99 = vmatpush1.msra.mxu0 0.0
    %100 = vmatprep.subr.mxu0 0.0
    %101 = vmatpush1.msra.mxu0 0.0
    %102 = vmatprep.subr.mxu0 0.0
    %103 = vmatpush1.msra.mxu0 0.0
    %104 = vmatprep.subr.mxu0 0.0
    %105 = vmatpush1.msra.mxu0 0.0
    %106 = vmatprep.subr.mxu0 0.0
    %107 = vmatpush1.msra.mxu0 0.0
    %108 = vmatprep.subr.mxu0 0.0
    %109 = vmatpush1.msra.mxu0 0.0
    %110 = vmatprep.subr.mxu0 0.0
    %111 = vmatpush1.msra.mxu0 0.0
    %112 = vmatprep.subr.mxu0 0.0
    %113 = vmatpush1.msra.mxu0 0.0
    %114 = vmatprep.subr.mxu0 0.0
    %115 = vmatpush1.msra.mxu0 0.0
    %116 = vmatprep.subr.mxu0 0.0
    %117 = vmatpush1.msra.mxu0 0.0
    %118 = vmatprep.subr.mxu0 0.0
    %119 = vmatpush1.msra.mxu0 0.0
    %120 = vmatprep.subr.mxu0 0.0
    %121 = vmatpush1.msra.mxu0 0.0
    %122 = vmatprep.mubr.f32.mxu0 0.0
    %123 = vmatmul.mubr.f32.gmra.mrb[0].mxu0 %v49
    %v124 = vpop.f32.mrb[0].mxu0
    %v125 = vadd.f32 %v45, %v124
    %v126 = vpop.f32.mrb[0].mxu0
    %127 = vmatprep.mubr.f32.mxu0 0.0
    %128 = vmatmul.mubr.f32.gmra.mrb[0].mxu0 %v52
    %v129 = vpop.f32.mrb[0].mxu0
    %v130 = vadd.f32 %v45, %v129
    %v131 = vpop.f32.mrb[0].mxu0
    %132 = vdwg.mxu0
    %133 = vst [vmem:[#allocation2] sm:$0xff] %v125
    %134 = vst [vmem:[#allocation2 + $0x8] sm:$0xff] %v130
    %v135 = vld [vmem:[%s6] sm:$0x3f]
    %v137 = vsel %vm54, %v135, 0
    %139 = vmatprep.subr.mxu0 0.0
    %140 = vmatpush1.msra.mxu0 %v137
    %141 = vmatprep.subr.mxu0 0.0
    %142 = vmatpush1.msra.mxu0 0.0
    %143 = vmatprep.subr.mxu0 0.0
    %144 = vmatpush1.msra.mxu0 0.0
    %145 = vmatprep.subr.mxu0 0.0
    %146 = vmatpush1.msra.mxu0 0.0
    %147 = vmatprep.subr.mxu0 0.0
    %148 = vmatpush1.msra.mxu0 0.0
    %149 = vmatprep.subr.mxu0 0.0
    %150 = vmatpush1.msra.mxu0 0.0
    %151 = vmatprep.subr.mxu0 0.0
    %152 = vmatpush1.msra.mxu0 0.0
    %153 = vmatprep.subr.mxu0 0.0
    %154 = vmatpush1.msra.mxu0 0.0
    %155 = vmatprep.subr.mxu0 0.0
    %156 = vmatpush1.msra.mxu0 0.0
    %157 = vmatprep.subr.mxu0 0.0
    %158 = vmatpush1.msra.mxu0 0.0
    %159 = vmatprep.subr.mxu0 0.0
    %160 = vmatpush1.msra.mxu0 0.0
    %161 = vmatprep.subr.mxu0 0.0
    %162 = vmatpush1.msra.mxu0 0.0
    %163 = vmatprep.subr.mxu0 0.0
    %164 = vmatpush1.msra.mxu0 0.0
    %165 = vmatprep.subr.mxu0 0.0
    %166 = vmatpush1.msra.mxu0 0.0
    %167 = vmatprep.subr.mxu0 0.0
    %168 = vmatpush1.msra.mxu0 0.0
    %169 = vmatprep.subr.mxu0 0.0
    %170 = vmatpush1.msra.mxu0 0.0
    %171 = vmatprep.subr.mxu0 0.0
    %172 = vmatpush1.msra.mxu0 0.0
    %173 = vmatprep.subr.mxu0 0.0
    %174 = vmatpush1.msra.mxu0 0.0
    %175 = vmatprep.subr.mxu0 0.0
    %176 = vmatpush1.msra.mxu0 0.0
    %177 = vmatprep.subr.mxu0 0.0
    %178 = vmatpush1.msra.mxu0 0.0
    %179 = vmatprep.subr.mxu0 0.0
    %180 = vmatpush1.msra.mxu0 0.0
    %181 = vmatprep.subr.mxu0 0.0
    %182 = vmatpush1.msra.mxu0 0.0
    %183 = vmatprep.subr.mxu0 0.0
    %184 = vmatpush1.msra.mxu0 0.0
    %185 = vmatprep.subr.mxu0 0.0
    %186 = vmatpush1.msra.mxu0 0.0
    %187 = vmatprep.subr.mxu0 0.0
    %188 = vmatpush1.msra.mxu0 0.0
    %189 = vmatprep.subr.mxu0 0.0
    %190 = vmatpush1.msra.mxu0 0.0
    %191 = vmatprep.subr.mxu0 0.0
    %192 = vmatpush1.msra.mxu0 0.0
    %193 = vmatprep.subr.mxu0 0.0
    %194 = vmatpush1.msra.mxu0 0.0
    %195 = vmatprep.subr.mxu0 0.0
    %196 = vmatpush1.msra.mxu0 0.0
    %197 = vmatprep.subr.mxu0 0.0
    %198 = vmatpush1.msra.mxu0 0.0
    %199 = vmatprep.subr.mxu0 0.0
    %200 = vmatpush1.msra.mxu0 0.0
    %201 = vmatprep.subr.mxu0 0.0
    %202 = vmatpush1.msra.mxu0 0.0
    %203 = vmatprep.mubr.f32.mxu0 0.0
    %204 = vmatmul.mubr.f32.gmra.mrb[0].mxu0 %v49
    %v205 = vpop.f32.mrb[0].mxu0
    %v206 = vadd.f32 0.0, %v205
    %v207 = vpop.f32.mrb[0].mxu0
    %208 = vmatprep.mubr.f32.mxu0 0.0
    %209 = vmatmul.mubr.f32.gmra.mrb[0].mxu0 %v52
    %v210 = vpop.f32.mrb[0].mxu0
    %v211 = vadd.f32 0.0, %v210
    %v212 = vpop.f32.mrb[0].mxu0
    %213 = vdwg.mxu0
    %214 = vst [vmem:[#allocation3] sm:$0xff] %v206
    %215 = vst [vmem:[#allocation3 + $0x8] sm:$0xff] %v211
    %216 = vst [vmem:[%s10] sm:$0xff] -inf
    %217 = vst [vmem:[%s10 + $0x8] sm:$0xff] -inf
  $region37: #{pointnet_forward.2} parent=0 // pred_fallthru
    _
  %v218 = vld [vmem:[%s2] sm:$0xff]
  %v219 = vld [vmem:[%s2 + $0x8] sm:$0xff]
  %v220 = vld [vmem:[%s2 + $0x10] sm:$0xff]
  %v221 = vld [vmem:[%s2 + $0x18] sm:$0xff]
  %v222 = vld [vmem:[%s3] sm:$0xff]
  %v223 = vld [vmem:[%s3 + $0x8] sm:$0xff]
  %v224 = vld [vmem:[%s3 + $0x10] sm:$0xff]
  %v225 = vld [vmem:[%s3 + $0x18] sm:$0xff]
  %v226 = vlaneseq
  %v227 = vand.u32 %v226, 127
  %228 = vset.pattern.permute.xlu0 0
  %229 = vperm.xlu0 %228, %v218
  %v230 = vpop.permute.xlu0 %229
  %231 = vset.pattern.permute.xlu0 0
  %232 = vperm.xlu0 %231, %v219
  %v233 = vpop.permute.xlu0 %232
  %234 = vset.pattern.permute.xlu0 0
  %235 = vperm.xlu0 %234, %v220
  %v236 = vpop.permute.xlu0 %235
  %237 = vset.pattern.permute.xlu0 0
  %238 = vperm.xlu0 %237, %v221
  %v239 = vpop.permute.xlu0 %238
  %vm240 = vcmp.eq.s32.totalorder %v227, %v230
  %vm241 = vcmp.eq.s32.totalorder %v227, %v233
  %vm242 = vcmp.eq.s32.totalorder %v227, %v236
  %vm243 = vcmp.eq.s32.totalorder %v227, %v239
  %v244 = vsel %vm240, 1, 0
  %v245 = vsel %vm241, 1, 0
  %v246 = vsel %vm242, 1, 0
  %v247 = vsel %vm243, 1, 0
  %v248 = vcvt.s32.f32 %v244
  %v249 = vcvt.s32.f32 %v245
  %v250 = vcvt.s32.f32 %v246
  %v251 = vcvt.s32.f32 %v247
  %252 = vset.pattern.permute.xlu0 0
  %253 = vperm.xlu0 %252, %v222
  %v254 = vpop.permute.xlu0 %253
  %255 = vset.pattern.permute.xlu0 0
  %256 = vperm.xlu0 %255, %v223
  %v257 = vpop.permute.xlu0 %256
  %258 = vset.pattern.permute.xlu0 0
  %259 = vperm.xlu0 %258, %v224
  %v260 = vpop.permute.xlu0 %259
  %261 = vset.pattern.permute.xlu0 0
  %262 = vperm.xlu0 %261, %v225
  %v263 = vpop.permute.xlu0 %262
  %vm264 = vcmp.eq.s32.totalorder %v227, %v254
  %vm265 = vcmp.eq.s32.totalorder %v227, %v257
  %vm266 = vcmp.eq.s32.totalorder %v227, %v260
  %vm267 = vcmp.eq.s32.totalorder %v227, %v263
  %v268 = vsel %vm264, 1, 0
  %v269 = vsel %vm265, 1, 0
  %v270 = vsel %vm266, 1, 0
  %v271 = vsel %vm267, 1, 0
  %v272 = vcvt.s32.f32 %v268
  %v273 = vcvt.s32.f32 %v269
  %v274 = vcvt.s32.f32 %v270
  %v275 = vcvt.s32.f32 %v271
  %v276 = vld [vmem:[#allocation2] sm:$0xff]
  %v277 = vld [vmem:[#allocation2 + $0x8] sm:$0xff]
  %vm278 = vcmask 130048
  %v280 = vsel %vm278, %v248, 0
  %v283 = vsel %vm278, %v249, 0
  %v286 = vsel %vm278, %v250, 0
  %v289 = vsel %vm278, %v251, 0
  %291 = vmatprep.subr.mxu0 0.0
  %292 = vmatpush1.msra.mxu0 %v276
  %293 = vmatprep.subr.mxu0 0.0
  %294 = vmatpush1.msra.mxu0 %v277
  %295 = vmatprep.subr.mxu0 0.0
  %296 = vmatpush1.msra.mxu0 0.0
  %297 = vmatprep.subr.mxu0 0.0
  %298 = vmatpush1.msra.mxu0 0.0
  %299 = vmatprep.subr.mxu0 0.0
  %300 = vmatpush1.msra.mxu0 0.0
  %301 = vmatprep.subr.mxu0 0.0
  %302 = vmatpush1.msra.mxu0 0.0
  %303 = vmatprep.subr.mxu0 0.0
  %304 = vmatpush1.msra.mxu0 0.0
  %305 = vmatprep.subr.mxu0 0.0
  %306 = vmatpush1.msra.mxu0 0.0
  %307 = vmatprep.subr.mxu0 0.0
  %308 = vmatpush1.msra.mxu0 0.0
  %309 = vmatprep.subr.mxu0 0.0
  %310 = vmatpush1.msra.mxu0 0.0
  %311 = vmatprep.subr.mxu0 0.0
  %312 = vmatpush1.msra.mxu0 0.0
  %313 = vmatprep.subr.mxu0 0.0
  %314 = vmatpush1.msra.mxu0 0.0
  %315 = vmatprep.subr.mxu0 0.0
  %316 = vmatpush1.msra.mxu0 0.0
  %317 = vmatprep.subr.mxu0 0.0
  %318 = vmatpush1.msra.mxu0 0.0
  %319 = vmatprep.subr.mxu0 0.0
  %320 = vmatpush1.msra.mxu0 0.0
  %321 = vmatprep.subr.mxu0 0.0
  %322 = vmatpush1.msra.mxu0 0.0
  %323 = vmatprep.subr.mxu0 0.0
  %324 = vmatpush1.msra.mxu0 0.0
  %325 = vmatprep.subr.mxu0 0.0
  %326 = vmatpush1.msra.mxu0 0.0
  %327 = vmatprep.subr.mxu0 0.0
  %328 = vmatpush1.msra.mxu0 0.0
  %329 = vmatprep.subr.mxu0 0.0
  %330 = vmatpush1.msra.mxu0 0.0
  %331 = vmatprep.subr.mxu0 0.0
  %332 = vmatpush1.msra.mxu0 0.0
  %333 = vmatprep.subr.mxu0 0.0
  %334 = vmatpush1.msra.mxu0 0.0
  %335 = vmatprep.subr.mxu0 0.0
  %336 = vmatpush1.msra.mxu0 0.0
  %337 = vmatprep.subr.mxu0 0.0
  %338 = vmatpush1.msra.mxu0 0.0
  %339 = vmatprep.subr.mxu0 0.0
  %340 = vmatpush1.msra.mxu0 0.0
  %341 = vmatprep.subr.mxu0 0.0
  %342 = vmatpush1.msra.mxu0 0.0
  %343 = vmatprep.subr.mxu0 0.0
  %344 = vmatpush1.msra.mxu0 0.0
  %345 = vmatprep.subr.mxu0 0.0
  %346 = vmatpush1.msra.mxu0 0.0
  %347 = vmatprep.subr.mxu0 0.0
  %348 = vmatpush1.msra.mxu0 0.0
  %349 = vmatprep.subr.mxu0 0.0
  %350 = vmatpush1.msra.mxu0 0.0
  %351 = vmatprep.subr.mxu0 0.0
  %352 = vmatpush1.msra.mxu0 0.0
  %353 = vmatprep.subr.mxu0 0.0
  %354 = vmatpush1.msra.mxu0 0.0
  %355 = vmatprep.mubr.f32.mxu0 0.0
  %356 = vmatmul.mubr.f32.gmra.mrb[0].mxu0 %v280
  %v357 = vpop.f32.mrb[0].mxu0
  %v358 = vadd.f32 0.0, %v357
  %v359 = vpop.f32.mrb[0].mxu0
  %360 = vmatprep.mubr.f32.mxu0 0.0
  %361 = vmatmul.mubr.f32.gmra.mrb[0].mxu0 %v283
  %v362 = vpop.f32.mrb[0].mxu0
  %v363 = vadd.f32 0.0, %v362
  %v364 = vpop.f32.mrb[0].mxu0
  %365 = vmatprep.mubr.f32.mxu0 0.0
  %366 = vmatmul.mubr.f32.gmra.mrb[0].mxu0 %v286
  %v367 = vpop.f32.mrb[0].mxu0
  %v368 = vadd.f32 0.0, %v367
  %v369 = vpop.f32.mrb[0].mxu0
  %370 = vmatprep.mubr.f32.mxu0 0.0
  %371 = vmatmul.mubr.f32.gmra.mrb[0].mxu0 %v289
  %v372 = vpop.f32.mrb[0].mxu0
  %v373 = vadd.f32 0.0, %v372
  %v374 = vpop.f32.mrb[0].mxu0
  %375 = vdwg.mxu0
  %v376 = vld [vmem:[#allocation3] sm:$0xff]
  %v377 = vld [vmem:[#allocation3 + $0x8] sm:$0xff]
  %v379 = vsel %vm278, %v272, 0
  %v382 = vsel %vm278, %v273, 0
  %v385 = vsel %vm278, %v274, 0
  %v388 = vsel %vm278, %v275, 0
  %390 = vmatprep.subr.mxu0 0.0
  %391 = vmatpush1.msra.mxu0 %v376
  %392 = vmatprep.subr.mxu0 0.0
  %393 = vmatpush1.msra.mxu0 %v377
  %394 = vmatprep.subr.mxu0 0.0
  %395 = vmatpush1.msra.mxu0 0.0
  %396 = vmatprep.subr.mxu0 0.0
  %397 = vmatpush1.msra.mxu0 0.0
  %398 = vmatprep.subr.mxu0 0.0
  %399 = vmatpush1.msra.mxu0 0.0
  %400 = vmatprep.subr.mxu0 0.0
  %401 = vmatpush1.msra.mxu0 0.0
  %402 = vmatprep.subr.mxu0 0.0
  %403 = vmatpush1.msra.mxu0 0.0
  %404 = vmatprep.subr.mxu0 0.0
  %405 = vmatpush1.msra.mxu0 0.0
  %406 = vmatprep.subr.mxu0 0.0
  %407 = vmatpush1.msra.mxu0 0.0
  %408 = vmatprep.subr.mxu0 0.0
  %409 = vmatpush1.msra.mxu0 0.0
  %410 = vmatprep.subr.mxu0 0.0
  %411 = vmatpush1.msra.mxu0 0.0
  %412 = vmatprep.subr.mxu0 0.0
  %413 = vmatpush1.msra.mxu0 0.0
  %414 = vmatprep.subr.mxu0 0.0
  %415 = vmatpush1.msra.mxu0 0.0
  %416 = vmatprep.subr.mxu0 0.0
  %417 = vmatpush1.msra.mxu0 0.0
  %418 = vmatprep.subr.mxu0 0.0
  %419 = vmatpush1.msra.mxu0 0.0
  %420 = vmatprep.subr.mxu0 0.0
  %421 = vmatpush1.msra.mxu0 0.0
  %422 = vmatprep.subr.mxu0 0.0
  %423 = vmatpush1.msra.mxu0 0.0
  %424 = vmatprep.subr.mxu0 0.0
  %425 = vmatpush1.msra.mxu0 0.0
  %426 = vmatprep.subr.mxu0 0.0
  %427 = vmatpush1.msra.mxu0 0.0
  %428 = vmatprep.subr.mxu0 0.0
  %429 = vmatpush1.msra.mxu0 0.0
  %430 = vmatprep.subr.mxu0 0.0
  %431 = vmatpush1.msra.mxu0 0.0
  %432 = vmatprep.subr.mxu0 0.0
  %433 = vmatpush1.msra.mxu0 0.0
  %434 = vmatprep.subr.mxu0 0.0
  %435 = vmatpush1.msra.mxu0 0.0
  %436 = vmatprep.subr.mxu0 0.0
  %437 = vmatpush1.msra.mxu0 0.0
  %438 = vmatprep.subr.mxu0 0.0
  %439 = vmatpush1.msra.mxu0 0.0
  %440 = vmatprep.subr.mxu0 0.0
  %441 = vmatpush1.msra.mxu0 0.0
  %442 = vmatprep.subr.mxu0 0.0
  %443 = vmatpush1.msra.mxu0 0.0
  %444 = vmatprep.subr.mxu0 0.0
  %445 = vmatpush1.msra.mxu0 0.0
  %446 = vmatprep.subr.mxu0 0.0
  %447 = vmatpush1.msra.mxu0 0.0
  %448 = vmatprep.subr.mxu0 0.0
  %449 = vmatpush1.msra.mxu0 0.0
  %450 = vmatprep.subr.mxu0 0.0
  %451 = vmatpush1.msra.mxu0 0.0
  %452 = vmatprep.subr.mxu0 0.0
  %453 = vmatpush1.msra.mxu0 0.0
  %454 = vmatprep.mubr.f32.mxu0 0.0
  %455 = vmatmul.mubr.f32.gmra.mrb[0].mxu0 %v379
  %v456 = vpop.f32.mrb[0].mxu0
  %v457 = vadd.f32 0.0, %v456
  %v458 = vpop.f32.mrb[0].mxu0
  %459 = vmatprep.mubr.f32.mxu0 0.0
  %460 = vmatmul.mubr.f32.gmra.mrb[0].mxu0 %v382
  %v461 = vpop.f32.mrb[0].mxu0
  %v462 = vadd.f32 0.0, %v461
  %v463 = vpop.f32.mrb[0].mxu0
  %464 = vmatprep.mubr.f32.mxu0 0.0
  %465 = vmatmul.mubr.f32.gmra.mrb[0].mxu0 %v385
  %v466 = vpop.f32.mrb[0].mxu0
  %v467 = vadd.f32 0.0, %v466
  %v468 = vpop.f32.mrb[0].mxu0
  %469 = vmatprep.mubr.f32.mxu0 0.0
  %470 = vmatmul.mubr.f32.gmra.mrb[0].mxu0 %v388
  %v471 = vpop.f32.mrb[0].mxu0
  %v472 = vadd.f32 0.0, %v471
  %v473 = vpop.f32.mrb[0].mxu0
  %474 = vdwg.mxu0
  %v475 = vsub.f32 %v358, %v457
  %v476 = vsub.f32 %v363, %v462
  %v477 = vsub.f32 %v368, %v467
  %v478 = vsub.f32 %v373, %v472
  %v479 = vmax.f32 %v475, 0.0
  %v480 = vmax.f32 %v476, 0.0
  %v481 = vmax.f32 %v477, 0.0
  %v482 = vmax.f32 %v478, 0.0
  %v483 = vld [vmem:[%s9] sm:$0xff]
  %v484 = vld [vmem:[%s9 + $0x8] sm:$0xff]
  %v485 = vld [vmem:[%s9 + $0x10] sm:$0xff]
  %v486 = vld [vmem:[%s9 + $0x18] sm:$0xff]
  %v487 = vld [vmem:[%s9 + $0x20] sm:$0xff]
  %v488 = vld [vmem:[%s9 + $0x28] sm:$0xff]
  %v489 = vld [vmem:[%s9 + $0x30] sm:$0xff]
  %v490 = vld [vmem:[%s9 + $0x38] sm:$0xff]
  %v491 = vld [vmem:[%s9 + $0x40] sm:$0xff]
  %v492 = vld [vmem:[%s9 + $0x48] sm:$0xff]
  %v493 = vld [vmem:[%s9 + $0x50] sm:$0xff]
  %v494 = vld [vmem:[%s9 + $0x58] sm:$0xff]
  %v495 = vld [vmem:[%s9 + $0x60] sm:$0xff]
  %v496 = vld [vmem:[%s9 + $0x68] sm:$0xff]
  %v497 = vld [vmem:[%s9 + $0x70] sm:$0xff]
  %v498 = vld [vmem:[%s9 + $0x78] sm:$0xff]
  %499 = vmatprep.subr.mxu0 0.0
  %500 = vmatpush1.msra.mxu0 %v483
  %501 = vmatprep.subr.mxu0 0.0
  %502 = vmatpush1.msra.mxu0 %v484
  %503 = vmatprep.subr.mxu0 0.0
  %504 = vmatpush1.msra.mxu0 %v485
  %505 = vmatprep.subr.mxu0 0.0
  %506 = vmatpush1.msra.mxu0 %v486
  %507 = vmatprep.subr.mxu0 0.0
  %508 = vmatpush1.msra.mxu0 %v487
  %509 = vmatprep.subr.mxu0 0.0
  %510 = vmatpush1.msra.mxu0 %v488
  %511 = vmatprep.subr.mxu0 0.0
  %512 = vmatpush1.msra.mxu0 %v489
  %513 = vmatprep.subr.mxu0 0.0
  %514 = vmatpush1.msra.mxu0 %v490
  %515 = vmatprep.subr.mxu0 0.0
  %516 = vmatpush1.msra.mxu0 %v491
  %517 = vmatprep.subr.mxu0 0.0
  %518 = vmatpush1.msra.mxu0 %v492
  %519 = vmatprep.subr.mxu0 0.0
  %520 = vmatpush1.msra.mxu0 %v493
  %521 = vmatprep.subr.mxu0 0.0
  %522 = vmatpush1.msra.mxu0 %v494
  %523 = vmatprep.subr.mxu0 0.0
  %524 = vmatpush1.msra.mxu0 %v495
  %525 = vmatprep.subr.mxu0 0.0
  %526 = vmatpush1.msra.mxu0 %v496
  %527 = vmatprep.subr.mxu0 0.0
  %528 = vmatpush1.msra.mxu0 %v497
  %529 = vmatprep.subr.mxu0 0.0
  %530 = vmatpush1.msra.mxu0 %v498
  %531 = vmatprep.subr.mxu0 0.0
  %532 = vmatpush1.msra.mxu0 0.0
  %533 = vmatprep.subr.mxu0 0.0
  %534 = vmatpush1.msra.mxu0 0.0
  %535 = vmatprep.subr.mxu0 0.0
  %536 = vmatpush1.msra.mxu0 0.0
  %537 = vmatprep.subr.mxu0 0.0
  %538 = vmatpush1.msra.mxu0 0.0
  %539 = vmatprep.subr.mxu0 0.0
  %540 = vmatpush1.msra.mxu0 0.0
  %541 = vmatprep.subr.mxu0 0.0
  %542 = vmatpush1.msra.mxu0 0.0
  %543 = vmatprep.subr.mxu0 0.0
  %544 = vmatpush1.msra.mxu0 0.0
  %545 = vmatprep.subr.mxu0 0.0
  %546 = vmatpush1.msra.mxu0 0.0
  %547 = vmatprep.subr.mxu0 0.0
  %548 = vmatpush1.msra.mxu0 0.0
  %549 = vmatprep.subr.mxu0 0.0
  %550 = vmatpush1.msra.mxu0 0.0
  %551 = vmatprep.subr.mxu0 0.0
  %552 = vmatpush1.msra.mxu0 0.0
  %553 = vmatprep.subr.mxu0 0.0
  %554 = vmatpush1.msra.mxu0 0.0
  %555 = vmatprep.subr.mxu0 0.0
  %556 = vmatpush1.msra.mxu0 0.0
  %557 = vmatprep.subr.mxu0 0.0
  %558 = vmatpush1.msra.mxu0 0.0
  %559 = vmatprep.subr.mxu0 0.0
  %560 = vmatpush1.msra.mxu0 0.0
  %561 = vmatprep.subr.mxu0 0.0
  %562 = vmatpush1.msra.mxu0 0.0
  %563 = vmatprep.mubr.f32.mxu0 0.0
  %564 = vmatmul.mubr.f32.gmra.mrb[0].mxu0 %v479
  %v565 = vpop.f32.mrb[0].mxu0
  %v566 = vadd.f32 0.0, %v565
  %v567 = vpop.f32.mrb[0].mxu0
  %568 = vmatprep.mubr.f32.mxu0 0.0
  %569 = vmatmul.mubr.f32.gmra.mrb[0].mxu0 %v480
  %v570 = vpop.f32.mrb[0].mxu0
  %v571 = vadd.f32 0.0, %v570
  %v572 = vpop.f32.mrb[0].mxu0
  %573 = vmatprep.mubr.f32.mxu0 0.0
  %574 = vmatmul.mubr.f32.gmra.mrb[0].mxu0 %v481
  %v575 = vpop.f32.mrb[0].mxu0
  %v576 = vadd.f32 0.0, %v575
  %v577 = vpop.f32.mrb[0].mxu0
  %578 = vmatprep.mubr.f32.mxu0 0.0
  %579 = vmatmul.mubr.f32.gmra.mrb[0].mxu0 %v482
  %v580 = vpop.f32.mrb[0].mxu0
  %v581 = vadd.f32 0.0, %v580
  %v582 = vpop.f32.mrb[0].mxu0
  %583 = vdwg.mxu0
  %s584 = sld [smem:[#allocation5]]
  %s585 = sld [smem:[#allocation6]]
  // While loop
  $region38: #{pointnet_forward.2} parent=0 // loop_pre_header
    _
  $region39: #{pointnet_forward.2} parent=0 // loop_header
    %s587 = sphi 0, %s589
    %p588 = scmp.ge.s32.totalorder %s587, %s585
  $region40: #{pointnet_forward.2} parent=0 // loop_header_branch
    %591 = sbr.rel (%p588) target = $region44
  $region41: #{pointnet_forward.2} parent=0 // loop_body
    %s592 = sadd.s32 %s584, %s587
    %s593 = smul.u32 %s592, 8
    %v594 = vstv %s593
    %vm595 = vcmp.eq.s32.totalorder %v222, %v594
    %vm596 = vcmp.eq.s32.totalorder %v223, %v594
    %vm597 = vcmp.eq.s32.totalorder %v224, %v594
    %vm598 = vcmp.eq.s32.totalorder %v225, %v594
    %v599 = vsel %vm595, 1, 0
    %v600 = vsel %vm596, 1, 0
    %v601 = vsel %vm597, 1, 0
    %v602 = vsel %vm598, 1, 0
    %603 = vset.pattern.permute.xlu0 0
    %604 = vperm.xlu0 %603, %v599
    %v605 = vpop.permute.xlu0 %604
    %606 = vset.pattern.permute.xlu0 0
    %607 = vperm.xlu0 %606, %v600
    %v608 = vpop.permute.xlu0 %607
    %609 = vset.pattern.permute.xlu0 0
    %610 = vperm.xlu0 %609, %v601
    %v611 = vpop.permute.xlu0 %610
    %612 = vset.pattern.permute.xlu0 0
    %613 = vperm.xlu0 %612, %v602
    %v614 = vpop.permute.xlu0 %613
    %vm615 = vcmp.eq.s32.totalorder %v605, 1
    %vm616 = vcmp.eq.s32.totalorder %v608, 1
    %vm617 = vcmp.eq.s32.totalorder %v611, 1
    %vm618 = vcmp.eq.s32.totalorder %v614, 1
    %v619 = vsel %vm615, %v566, -inf
    %v620 = vsel %vm616, %v571, -inf
    %v621 = vsel %vm617, %v576, -inf
    %v622 = vsel %vm618, %v581, -inf
    %v623 = vmax.f32 %v619, %v620
    %v624 = vmax.f32 %v621, %v622
    %v625 = vmax.f32 %v623, %v624
    %v626 = vrot.slane %v625, 4
    %v627 = vmax.f32 %v625, %v626
    %v628 = vrot.slane %v627, 2
    %v629 = vmax.f32 %v627, %v628
    %v630 = vrot.slane %v629, 1
    %v631 = vmax.f32 %v629, %v630
    %s632 = sadd.s32 %s593, 1
    %v633 = vstv %s632
    %vm634 = vcmp.eq.s32.totalorder %v222, %v633
    %vm635 = vcmp.eq.s32.totalorder %v223, %v633
    %vm636 = vcmp.eq.s32.totalorder %v224, %v633
    %vm637 = vcmp.eq.s32.totalorder %v225, %v633
    %v638 = vsel %vm634, 1, 0
    %v639 = vsel %vm635, 1, 0
    %v640 = vsel %vm636, 1, 0
    %v641 = vsel %vm637, 1, 0
    %642 = vset.pattern.permute.xlu0 0
    %643 = vperm.xlu0 %642, %v638
    %v644 = vpop.permute.xlu0 %643
    %645 = vset.pattern.permute.xlu0 0
    %646 = vperm.xlu0 %645, %v639
    %v647 = vpop.permute.xlu0 %646
    %648 = vset.pattern.permute.xlu0 0
    %649 = vperm.xlu0 %648, %v640
    %v650 = vpop.permute.xlu0 %649
    %651 = vset.pattern.permute.xlu0 0
    %652 = vperm.xlu0 %651, %v641
    %v653 = vpop.permute.xlu0 %652
    %vm654 = vcmp.eq.s32.totalorder %v644, 1
    %vm655 = vcmp.eq.s32.totalorder %v647, 1
    %vm656 = vcmp.eq.s32.totalorder %v650, 1
    %vm657 = vcmp.eq.s32.totalorder %v653, 1
    %v658 = vsel %vm654, %v566, -inf
    %v659 = vsel %vm655, %v571, -inf
    %v660 = vsel %vm656, %v576, -inf
    %v661 = vsel %vm657, %v581, -inf
    %v662 = vmax.f32 %v658, %v659
    %v663 = vmax.f32 %v660, %v661
    %v664 = vmax.f32 %v662, %v663
    %v665 = vrot.slane %v664, 4
    %v666 = vmax.f32 %v664, %v665
    %v667 = vrot.slane %v666, 2
    %v668 = vmax.f32 %v666, %v667
    %v669 = vrot.slane %v668, 1
    %v670 = vmax.f32 %v668, %v669
    %s671 = sadd.s32 %s593, 2
    %v672 = vstv %s671
    %vm673 = vcmp.eq.s32.totalorder %v222, %v672
    %vm674 = vcmp.eq.s32.totalorder %v223, %v672
    %vm675 = vcmp.eq.s32.totalorder %v224, %v672
    %vm676 = vcmp.eq.s32.totalorder %v225, %v672
    %v677 = vsel %vm673, 1, 0
    %v678 = vsel %vm674, 1, 0
    %v679 = vsel %vm675, 1, 0
    %v680 = vsel %vm676, 1, 0
    %681 = vset.pattern.permute.xlu0 0
    %682 = vperm.xlu0 %681, %v677
    %v683 = vpop.permute.xlu0 %682
    %684 = vset.pattern.permute.xlu0 0
    %685 = vperm.xlu0 %684, %v678
    %v686 = vpop.permute.xlu0 %685
    %687 = vset.pattern.permute.xlu0 0
    %688 = vperm.xlu0 %687, %v679
    %v689 = vpop.permute.xlu0 %688
    %690 = vset.pattern.permute.xlu0 0
    %691 = vperm.xlu0 %690, %v680
    %v692 = vpop.permute.xlu0 %691
    %vm693 = vcmp.eq.s32.totalorder %v683, 1
    %vm694 = vcmp.eq.s32.totalorder %v686, 1
    %vm695 = vcmp.eq.s32.totalorder %v689, 1
    %vm696 = vcmp.eq.s32.totalorder %v692, 1
    %v697 = vsel %vm693, %v566, -inf
    %v698 = vsel %vm694, %v571, -inf
    %v699 = vsel %vm695, %v576, -inf
    %v700 = vsel %vm696, %v581, -inf
    %v701 = vmax.f32 %v697, %v698
    %v702 = vmax.f32 %v699, %v700
    %v703 = vmax.f32 %v701, %v702
    %v704 = vrot.slane %v703, 4
    %v705 = vmax.f32 %v703, %v704
    %v706 = vrot.slane %v705, 2
    %v707 = vmax.f32 %v705, %v706
    %v708 = vrot.slane %v707, 1
    %v709 = vmax.f32 %v707, %v708
    %s710 = sadd.s32 %s593, 3
    %v711 = vstv %s710
    %vm712 = vcmp.eq.s32.totalorder %v222, %v711
    %vm713 = vcmp.eq.s32.totalorder %v223, %v711
    %vm714 = vcmp.eq.s32.totalorder %v224, %v711
    %vm715 = vcmp.eq.s32.totalorder %v225, %v711
    %v716 = vsel %vm712, 1, 0
    %v717 = vsel %vm713, 1, 0
    %v718 = vsel %vm714, 1, 0
    %v719 = vsel %vm715, 1, 0
    %720 = vset.pattern.permute.xlu0 0
    %721 = vperm.xlu0 %720, %v716
    %v722 = vpop.permute.xlu0 %721
    %723 = vset.pattern.permute.xlu0 0
    %724 = vperm.xlu0 %723, %v717
    %v725 = vpop.permute.xlu0 %724
    %726 = vset.pattern.permute.xlu0 0
    %727 = vperm.xlu0 %726, %v718
    %v728 = vpop.permute.xlu0 %727
    %729 = vset.pattern.permute.xlu0 0
    %730 = vperm.xlu0 %729, %v719
    %v731 = vpop.permute.xlu0 %730
    %vm732 = vcmp.eq.s32.totalorder %v722, 1
    %vm733 = vcmp.eq.s32.totalorder %v725, 1
    %vm734 = vcmp.eq.s32.totalorder %v728, 1
    %vm735 = vcmp.eq.s32.totalorder %v731, 1
    %v736 = vsel %vm732, %v566, -inf
    %v737 = vsel %vm733, %v571, -inf
    %v738 = vsel %vm734, %v576, -inf
    %v739 = vsel %vm735, %v581, -inf
    %v740 = vmax.f32 %v736, %v737
    %v741 = vmax.f32 %v738, %v739
    %v742 = vmax.f32 %v740, %v741
    %v743 = vrot.slane %v742, 4
    %v744 = vmax.f32 %v742, %v743
    %v745 = vrot.slane %v744, 2
    %v746 = vmax.f32 %v744, %v745
    %v747 = vrot.slane %v746, 1
    %v748 = vmax.f32 %v746, %v747
    %s749 = sadd.s32 %s593, 4
    %v750 = vstv %s749
    %vm751 = vcmp.eq.s32.totalorder %v222, %v750
    %vm752 = vcmp.eq.s32.totalorder %v223, %v750
    %vm753 = vcmp.eq.s32.totalorder %v224, %v750
    %vm754 = vcmp.eq.s32.totalorder %v225, %v750
    %v755 = vsel %vm751, 1, 0
    %v756 = vsel %vm752, 1, 0
    %v757 = vsel %vm753, 1, 0
    %v758 = vsel %vm754, 1, 0
    %759 = vset.pattern.permute.xlu0 0
    %760 = vperm.xlu0 %759, %v755
    %v761 = vpop.permute.xlu0 %760
    %762 = vset.pattern.permute.xlu0 0
    %763 = vperm.xlu0 %762, %v756
    %v764 = vpop.permute.xlu0 %763
    %765 = vset.pattern.permute.xlu0 0
    %766 = vperm.xlu0 %765, %v757
    %v767 = vpop.permute.xlu0 %766
    %768 = vset.pattern.permute.xlu0 0
    %769 = vperm.xlu0 %768, %v758
    %v770 = vpop.permute.xlu0 %769
    %vm771 = vcmp.eq.s32.totalorder %v761, 1
    %vm772 = vcmp.eq.s32.totalorder %v764, 1
    %vm773 = vcmp.eq.s32.totalorder %v767, 1
    %vm774 = vcmp.eq.s32.totalorder %v770, 1
    %v775 = vsel %vm771, %v566, -inf
    %v776 = vsel %vm772, %v571, -inf
    %v777 = vsel %vm773, %v576, -inf
    %v778 = vsel %vm774, %v581, -inf
    %v779 = vmax.f32 %v775, %v776
    %v780 = vmax.f32 %v777, %v778
    %v781 = vmax.f32 %v779, %v780
    %v782 = vrot.slane %v781, 4
    %v783 = vmax.f32 %v781, %v782
    %v784 = vrot.slane %v783, 2
    %v785 = vmax.f32 %v783, %v784
    %v786 = vrot.slane %v785, 1
    %v787 = vmax.f32 %v785, %v786
    %s788 = sadd.s32 %s593, 5
    %v789 = vstv %s788
    %vm790 = vcmp.eq.s32.totalorder %v222, %v789
    %vm791 = vcmp.eq.s32.totalorder %v223, %v789
    %vm792 = vcmp.eq.s32.totalorder %v224, %v789
    %vm793 = vcmp.eq.s32.totalorder %v225, %v789
    %v794 = vsel %vm790, 1, 0
    %v795 = vsel %vm791, 1, 0
    %v796 = vsel %vm792, 1, 0
    %v797 = vsel %vm793, 1, 0
    %798 = vset.pattern.permute.xlu0 0
    %799 = vperm.xlu0 %798, %v794
    %v800 = vpop.permute.xlu0 %799
    %801 = vset.pattern.permute.xlu0 0
    %802 = vperm.xlu0 %801, %v795
    %v803 = vpop.permute.xlu0 %802
    %804 = vset.pattern.permute.xlu0 0
    %805 = vperm.xlu0 %804, %v796
    %v806 = vpop.permute.xlu0 %805
    %807 = vset.pattern.permute.xlu0 0
    %808 = vperm.xlu0 %807, %v797
    %v809 = vpop.permute.xlu0 %808
    %vm810 = vcmp.eq.s32.totalorder %v800, 1
    %vm811 = vcmp.eq.s32.totalorder %v803, 1
    %vm812 = vcmp.eq.s32.totalorder %v806, 1
    %vm813 = vcmp.eq.s32.totalorder %v809, 1
    %v814 = vsel %vm810, %v566, -inf
    %v815 = vsel %vm811, %v571, -inf
    %v816 = vsel %vm812, %v576, -inf
    %v817 = vsel %vm813, %v581, -inf
    %v818 = vmax.f32 %v814, %v815
    %v819 = vmax.f32 %v816, %v817
    %v820 = vmax.f32 %v818, %v819
    %v821 = vrot.slane %v820, 4
    %v822 = vmax.f32 %v820, %v821
    %v823 = vrot.slane %v822, 2
    %v824 = vmax.f32 %v822, %v823
    %v825 = vrot.slane %v824, 1
    %v826 = vmax.f32 %v824, %v825
    %s827 = sadd.s32 %s593, 6
    %v828 = vstv %s827
    %vm829 = vcmp.eq.s32.totalorder %v222, %v828
    %vm830 = vcmp.eq.s32.totalorder %v223, %v828
    %vm831 = vcmp.eq.s32.totalorder %v224, %v828
    %vm832 = vcmp.eq.s32.totalorder %v225, %v828
    %v833 = vsel %vm829, 1, 0
    %v834 = vsel %vm830, 1, 0
    %v835 = vsel %vm831, 1, 0
    %v836 = vsel %vm832, 1, 0
    %837 = vset.pattern.permute.xlu0 0
    %838 = vperm.xlu0 %837, %v833
    %v839 = vpop.permute.xlu0 %838
    %840 = vset.pattern.permute.xlu0 0
    %841 = vperm.xlu0 %840, %v834
    %v842 = vpop.permute.xlu0 %841
    %843 = vset.pattern.permute.xlu0 0
    %844 = vperm.xlu0 %843, %v835
    %v845 = vpop.permute.xlu0 %844
    %846 = vset.pattern.permute.xlu0 0
    %847 = vperm.xlu0 %846, %v836
    %v848 = vpop.permute.xlu0 %847
    %vm849 = vcmp.eq.s32.totalorder %v839, 1
    %vm850 = vcmp.eq.s32.totalorder %v842, 1
    %vm851 = vcmp.eq.s32.totalorder %v845, 1
    %vm852 = vcmp.eq.s32.totalorder %v848, 1
    %v853 = vsel %vm849, %v566, -inf
    %v854 = vsel %vm850, %v571, -inf
    %v855 = vsel %vm851, %v576, -inf
    %v856 = vsel %vm852, %v581, -inf
    %v857 = vmax.f32 %v853, %v854
    %v858 = vmax.f32 %v855, %v856
    %v859 = vmax.f32 %v857, %v858
    %v860 = vrot.slane %v859, 4
    %v861 = vmax.f32 %v859, %v860
    %v862 = vrot.slane %v861, 2
    %v863 = vmax.f32 %v861, %v862
    %v864 = vrot.slane %v863, 1
    %v865 = vmax.f32 %v863, %v864
    %s866 = sadd.s32 %s593, 7
    %v867 = vstv %s866
    %vm868 = vcmp.eq.s32.totalorder %v222, %v867
    %vm869 = vcmp.eq.s32.totalorder %v223, %v867
    %vm870 = vcmp.eq.s32.totalorder %v224, %v867
    %vm871 = vcmp.eq.s32.totalorder %v225, %v867
    %v872 = vsel %vm868, 1, 0
    %v873 = vsel %vm869, 1, 0
    %v874 = vsel %vm870, 1, 0
    %v875 = vsel %vm871, 1, 0
    %876 = vset.pattern.permute.xlu0 0
    %877 = vperm.xlu0 %876, %v872
    %v878 = vpop.permute.xlu0 %877
    %879 = vset.pattern.permute.xlu0 0
    %880 = vperm.xlu0 %879, %v873
    %v881 = vpop.permute.xlu0 %880
    %882 = vset.pattern.permute.xlu0 0
    %883 = vperm.xlu0 %882, %v874
    %v884 = vpop.permute.xlu0 %883
    %885 = vset.pattern.permute.xlu0 0
    %886 = vperm.xlu0 %885, %v875
    %v887 = vpop.permute.xlu0 %886
    %vm888 = vcmp.eq.s32.totalorder %v878, 1
    %vm889 = vcmp.eq.s32.totalorder %v881, 1
    %vm890 = vcmp.eq.s32.totalorder %v884, 1
    %vm891 = vcmp.eq.s32.totalorder %v887, 1
    %v892 = vsel %vm888, %v566, -inf
    %v893 = vsel %vm889, %v571, -inf
    %v894 = vsel %vm890, %v576, -inf
    %v895 = vsel %vm891, %v581, -inf
    %v896 = vmax.f32 %v892, %v893
    %v897 = vmax.f32 %v894, %v895
    %v898 = vmax.f32 %v896, %v897
    %v899 = vrot.slane %v898, 4
    %v900 = vmax.f32 %v898, %v899
    %v901 = vrot.slane %v900, 2
    %v902 = vmax.f32 %v900, %v901
    %v903 = vrot.slane %v902, 1
    %v904 = vmax.f32 %v902, %v903
    %vm905 = vcmask 1040384
    %v906 = vsel %vm905, %v631, %v670
    %vm907 = vcmask 1041408
    %v908 = vsel %vm907, %v906, %v709
    %vm909 = vcmask 1042432
    %v910 = vsel %vm909, %v908, %v748
    %vm911 = vcmask 1043456
    %v912 = vsel %vm911, %v910, %v787
    %vm913 = vcmask 1044480
    %v914 = vsel %vm913, %v912, %v826
    %vm915 = vcmask 1045504
    %v916 = vsel %vm915, %v914, %v865
    %vm917 = vcmask 1046528
    %v918 = vsel %vm917, %v916, %v904
    %s919 = scalar_lea.vmem %s10, %s593
    %v920 = vld [vmem:[%s919] sm:$0xff]
    %v921 = vmax.f32 %v920, %v918
    %922 = vst [vmem:[%s919] sm:$0xff] %v921
  $region42: #{pointnet_forward.2} parent=0 // loop_footer
    %s589 = sadd.s32 %s587, 1
  $region43: #{pointnet_forward.2} parent=0 // loop_footer_branch
    %586 = sbr.rel target = $region39
  $region44: #{pointnet_forward.2} parent=0 // loop_exit
    _
  // Predicated region
  $region45: #{pointnet_forward.2} parent=0 // pred_check
    %p923 = pneg %p33
  $region46: #{pointnet_forward.2} parent=0 // pred_check_branch
    %925 = sbr.rel (%p923) target = $region48
  $region47: #{pointnet_forward.2} parent=0 // pred_region
    %v926 = vld [vmem:[%s10] sm:$0xff]
    %v927 = vld [vmem:[%s10 + $0x8] sm:$0xff]
    %v928 = vld [vmem:[%s8] sm:$0x1]
    %v930 = vlaneseq
    %v931 = vshrl.u32 %v930, 7
    %v932 = vsub.s32 0, %v931
    %v933 = vrot.slane %v928, %v932
    %v935 = vadd.f32 %v926, %v933
    %v936 = vadd.f32 %v927, %v933
    %v937 = vmax.f32 %v935, 0.0
    %v938 = vmax.f32 %v936, 0.0
    %939 = vst [vmem:[%s10] sm:$0xff] %v937
    %940 = vst [vmem:[%s10 + $0x8] sm:$0xff] %v938
  $region48: #{pointnet_forward.2} parent=0 // pred_fallthru
    _
  // Predicated region
  $region49: #{pointnet_forward.2} parent=0 // pred_check
    _
  $region50: #{pointnet_forward.2} parent=0 // pred_check_branch
    %942 = sbr.rel (0) target = $region52
  $region51: #{pointnet_forward.2} parent=0 // pred_region
    _
  $region52: #{pointnet_forward.2} parent=0 // pred_fallthru
    _
  // Predicated region
  $region53: #{pointnet_forward.2} parent=0 // pred_check
    _
  $region54: #{pointnet_forward.2} parent=0 // pred_check_branch
    %944 = sbr.rel (0) target = $region56
  $region55: #{pointnet_forward.2} parent=0 // pred_region
    _
  $region56: #{pointnet_forward.2} parent=0 // pred_fallthru
    _

</llo_original>
